<compile_context>
chip_gen: v5e
topology: v5e:2x2
jax: 0.10.0
libtpu: 0.0.40
codegen_flags: <defaults>
</compile_context>

<pallas_src>
import jax
import jax.numpy as jnp
from jax.experimental import pallas as pl
from jax.experimental.pallas import tpu as pltpu


def _round_up(x, m):
    return (x + m - 1) // m * m


# ---------------------------------------------------------------- kernel ----

def _dense_fused_kernel(s_ref, v_ref,
                        w1s_ref, w1v_ref, b1_ref,
                        w2o_ref, w2v_ref, b2_ref,
                        w3o_ref, w3v_ref, b3_ref,
                        o_ref):
    # s: (tm, n_screen) bf16, v: (tm, n_var) bf16, weights bf16, biases f32.
    s = s_ref[...]
    v = v_ref[...]

    # fc1: relu(cat([s, v]) @ W1.T + b1) == relu(s @ W1s + v @ W1v + b1)
    h1 = jnp.dot(s, w1s_ref[...], preferred_element_type=jnp.float32)
    h1 = h1 + jnp.dot(v, w1v_ref[...], preferred_element_type=jnp.float32)
    h1 = jnp.maximum(h1 + b1_ref[...], 0.0)

    # fc2
    h2 = jnp.dot(h1.astype(jnp.bfloat16), w2o_ref[...],
                 preferred_element_type=jnp.float32)
    h2 = h2 + jnp.dot(v, w2v_ref[...], preferred_element_type=jnp.float32)
    h2 = jnp.maximum(h2 + b2_ref[...], 0.0)

    # fc3
    h3 = jnp.dot(h2.astype(jnp.bfloat16), w3o_ref[...],
                 preferred_element_type=jnp.float32)
    h3 = h3 + jnp.dot(v, w3v_ref[...], preferred_element_type=jnp.float32)
    h3 = jnp.maximum(h3 + b3_ref[...], 0.0)

    o_ref[...] = h3.astype(o_ref.dtype)


# --------------------------------------------------------------- wrapper ----

def dense_network_forward(screen, variables, params, *, block_m=128):
    """Forward pass equivalent to the PyTorch DenseNetwork (inference)."""
    b, n_screen = screen.shape
    n_var = variables.shape[1]
    n_h1 = params["w1"].shape[0]          # 256
    n_h2 = params["w2"].shape[0]          # 64
    n_act = params["w3"].shape[0]

    # Split PyTorch (out, in) weights into the "x" part and the "variables"
    # part, transpose to (in, out), cast to bf16 for the MXU.
    w1 = params["w1"]
    w1s = jnp.transpose(w1[:, :n_screen]).astype(jnp.bfloat16)     # (n_screen, 256)
    w1v = jnp.transpose(w1[:, n_screen:]).astype(jnp.bfloat16)     # (n_var, 256)
    w2 = params["w2"]
    w2o = jnp.transpose(w2[:, :n_h1]).astype(jnp.bfloat16)         # (256, 64)
    w2v = jnp.transpose(w2[:, n_h1:]).astype(jnp.bfloat16)         # (n_var, 64)
    w3 = params["w3"]
    w3o = jnp.transpose(w3[:, :n_h2]).astype(jnp.bfloat16)         # (64, n_act)
    w3v = jnp.transpose(w3[:, n_h2:]).astype(jnp.bfloat16)         # (n_var, n_act)
    b1 = params["b1"].reshape(1, n_h1).astype(jnp.float32)
    b2 = params["b2"].reshape(1, n_h2).astype(jnp.float32)
    b3 = params["b3"].reshape(1, n_act).astype(jnp.float32)

    # Tile the batch; pad to a sublane-aligned multiple of the tile.
    tm = min(block_m, _round_up(b, 8))
    bp = _round_up(b, tm)
    s = screen.astype(jnp.bfloat16)
    v = variables.astype(jnp.bfloat16)
    if bp != b:
        s = jnp.pad(s, ((0, bp - b), (0, 0)))
        v = jnp.pad(v, ((0, bp - b), (0, 0)))

    def _row_spec(cols):
        return pl.BlockSpec((tm, cols), lambda i: (i, 0))

    def _const_spec(shape):
        return pl.BlockSpec(shape, lambda i: (0, 0))

    out = pl.pallas_call(
        _dense_fused_kernel,
        out_shape=jax.ShapeDtypeStruct((bp, n_act), jnp.float32),
        grid=(bp // tm,),
        in_specs=[
            _row_spec(n_screen),                 # screen tile
            _row_spec(n_var),                    # variables tile
            _const_spec((n_screen, n_h1)),       # w1s
            _const_spec((n_var, n_h1)),          # w1v
            _const_spec((1, n_h1)),              # b1
            _const_spec((n_h1, n_h2)),           # w2o
            _const_spec((n_var, n_h2)),          # w2v
            _const_spec((1, n_h2)),              # b2
            _const_spec((n_h2, n_act)),          # w3o
            _const_spec((n_var, n_act)),         # w3v
            _const_spec((1, n_act)),             # b3
        ],
        out_specs=_row_spec(n_act),
        compiler_params=pltpu.CompilerParams(
            dimension_semantics=("parallel",)),
    )(s, v, w1s, w1v, b1, w2o, w2v, b2, w3o, w3v, b3)

    return out[:b]


# ------------------------------------------------------------- reference ----

def reference_forward(screen, variables, params):
    x = jnp.concatenate([screen, variables], axis=1)
    h = jax.nn.relu(x @ params["w1"].T + params["b1"])
    x = jnp.concatenate([h, variables], axis=1)
    h = jax.nn.relu(x @ params["w2"].T + params["b2"])
    x = jnp.concatenate([h, variables], axis=1)
    return jax.nn.relu(x @ params["w3"].T + params["b3"])


def init_params(n_actions, n_variables, key):
    """PyTorch nn.Linear default init: U(-1/sqrt(fan_in), 1/sqrt(fan_in))."""
    sizes = [(256, 1536 + n_variables),
             (64, 256 + n_variables),
             (n_actions, 64 + n_variables)]
    params = {}
    for idx, (fan_out, fan_in) in enumerate(sizes, start=1):
        key, kw, kb = jax.random.split(key, 3)
        bound = 1.0 / jnp.sqrt(float(fan_in))
        params[f"w{idx}"] = jax.random.uniform(
            kw, (fan_out, fan_in), jnp.float32, -bound, bound)
        params[f"b{idx}"] = jax.random.uniform(
            kb, (fan_out,), jnp.float32, -bound, bound)
    return params


if __name__ == "__main__":
    key = jax.random.PRNGKey(0)
    n_actions, n_variables = 8, 4
    batch = 32

    ks, kv, kp = jax.random.split(key, 3)
    screen = jax.random.normal(ks, (batch, 1536), jnp.float32)
    variables = jax.random.normal(kv, (batch, n_variables), jnp.float32)
    params = init_params(n_actions, n_variables, kp)

    # block_m=16 so the demo exercises a multi-step ("parallel") batch grid.
    fwd = jax.jit(lambda s, v: dense_network_forward(s, v, params, block_m=16))
    out = fwd(screen, variables)
    jax.block_until_ready(out)

    assert out.shape == (batch, n_actions), out.shape
    assert bool(jnp.all(jnp.isfinite(out)))

    # Correctness vs. a pure-JAX f32 reference (bf16 MXU inputs => loose tol).
    ref = reference_forward(screen, variables, params)
    assert bool(jnp.allclose(out, ref, rtol=5e-2, atol=5e-2)), (
        float(jnp.max(jnp.abs(out - ref))))
    print("KERNEL_OK")
</pallas_src>

<mosaic_0001>
module attributes {stable_mosaic.version = 11 : i64} {
  func.func @_dense_fused_kernel(%arg0: i32, %arg1: memref<16x1536xbf16, #tpu.memory_space<vmem>>, %arg2: memref<16x4xbf16, #tpu.memory_space<vmem>>, %arg3: memref<1536x256xbf16, #tpu.memory_space<vmem>>, %arg4: memref<4x256xbf16, #tpu.memory_space<vmem>>, %arg5: memref<1x256xf32, #tpu.memory_space<vmem>>, %arg6: memref<256x64xbf16, #tpu.memory_space<vmem>>, %arg7: memref<4x64xbf16, #tpu.memory_space<vmem>>, %arg8: memref<1x64xf32, #tpu.memory_space<vmem>>, %arg9: memref<64x8xbf16, #tpu.memory_space<vmem>>, %arg10: memref<4x8xbf16, #tpu.memory_space<vmem>>, %arg11: memref<1x8xf32, #tpu.memory_space<vmem>>, %arg12: memref<16x8xf32, #tpu.memory_space<vmem>>) attributes {dimension_semantics = [#tpu.dimension_semantics<parallel>], iteration_bounds = array<i64: 2>, scalar_prefetch = 0 : i64, scratch_operands = 0 : i64, tpu.core_type = #tpu.core_type<tc>, window_params = [{transform_indices = @transform_0, window_bounds = array<i64: 16, 1536>}, {transform_indices = @transform_1, window_bounds = array<i64: 16, 4>}, {pipeline_mode = #tpu.pipeline_mode<synchronous>, transform_indices = @transform_2, window_bounds = array<i64: 1536, 256>}, {pipeline_mode = #tpu.pipeline_mode<synchronous>, transform_indices = @transform_3, window_bounds = array<i64: 4, 256>}, {pipeline_mode = #tpu.pipeline_mode<synchronous>, transform_indices = @transform_4, window_bounds = array<i64: 1, 256>}, {pipeline_mode = #tpu.pipeline_mode<synchronous>, transform_indices = @transform_5, window_bounds = array<i64: 256, 64>}, {pipeline_mode = #tpu.pipeline_mode<synchronous>, transform_indices = @transform_6, window_bounds = array<i64: 4, 64>}, {pipeline_mode = #tpu.pipeline_mode<synchronous>, transform_indices = @transform_7, window_bounds = array<i64: 1, 64>}, {pipeline_mode = #tpu.pipeline_mode<synchronous>, transform_indices = @transform_8, window_bounds = array<i64: 64, 8>}, {pipeline_mode = #tpu.pipeline_mode<synchronous>, transform_indices = @transform_9, window_bounds = array<i64: 4, 8>}, {pipeline_mode = #tpu.pipeline_mode<synchronous>, transform_indices = @transform_10, window_bounds = array<i64: 1, 8>}, {transform_indices = @transform_11, window_bounds = array<i64: 16, 8>}]} {
    %c0 = arith.constant 0 : index
    %c0_0 = arith.constant 0 : index
    %0 = vector.load %arg1[%c0, %c0_0] : memref<16x1536xbf16, #tpu.memory_space<vmem>>, vector<16x1536xbf16>
    %c0_1 = arith.constant 0 : index
    %c0_2 = arith.constant 0 : index
    %1 = vector.load %arg2[%c0_1, %c0_2] : memref<16x4xbf16, #tpu.memory_space<vmem>>, vector<16x4xbf16>
    %c0_3 = arith.constant 0 : index
    %c0_4 = arith.constant 0 : index
    %2 = vector.load %arg3[%c0_3, %c0_4] : memref<1536x256xbf16, #tpu.memory_space<vmem>>, vector<1536x256xbf16>
    %cst = arith.constant dense<0.000000e+00> : vector<16x256xf32>
    %3 = tpu.matmul %0, %2, %cst {dimension_numbers = #tpu.dot_dimension_numbers<[1], [0], [0], [1], [0, 0, 1, 1], [], []>} : vector<16x1536xbf16>, vector<1536x256xbf16>, vector<16x256xf32> -> vector<16x256xf32>
    %c0_5 = arith.constant 0 : index
    %c0_6 = arith.constant 0 : index
    %4 = vector.load %arg4[%c0_5, %c0_6] : memref<4x256xbf16, #tpu.memory_space<vmem>>, vector<4x256xbf16>
    %cst_7 = arith.constant dense<0.000000e+00> : vector<16x256xf32>
    %5 = tpu.matmul %1, %4, %cst_7 {dimension_numbers = #tpu.dot_dimension_numbers<[1], [0], [0], [1], [0, 0, 1, 1], [], []>} : vector<16x4xbf16>, vector<4x256xbf16>, vector<16x256xf32> -> vector<16x256xf32>
    %6 = arith.addf %3, %5 : vector<16x256xf32>
    %c0_8 = arith.constant 0 : index
    %c0_9 = arith.constant 0 : index
    %7 = vector.load %arg5[%c0_8, %c0_9] : memref<1x256xf32, #tpu.memory_space<vmem>>, vector<1x256xf32>
    %8 = vector.broadcast %7 : vector<1x256xf32> to vector<16x256xf32>
    %9 = arith.addf %6, %8 : vector<16x256xf32>
    %cst_10 = arith.constant 0.000000e+00 : f32
    %10 = vector.broadcast %cst_10 : f32 to vector<16x256xf32>
    %11 = arith.maximumf %9, %10 : vector<16x256xf32>
    %12 = arith.truncf %11 : vector<16x256xf32> to vector<16x256xbf16>
    %c0_11 = arith.constant 0 : index
    %c0_12 = arith.constant 0 : index
    %13 = vector.load %arg6[%c0_11, %c0_12] : memref<256x64xbf16, #tpu.memory_space<vmem>>, vector<256x64xbf16>
    %cst_13 = arith.constant dense<0.000000e+00> : vector<16x64xf32>
    %14 = tpu.matmul %12, %13, %cst_13 {dimension_numbers = #tpu.dot_dimension_numbers<[1], [0], [0], [1], [0, 0, 1, 1], [], []>} : vector<16x256xbf16>, vector<256x64xbf16>, vector<16x64xf32> -> vector<16x64xf32>
    %c0_14 = arith.constant 0 : index
    %c0_15 = arith.constant 0 : index
    %15 = vector.load %arg7[%c0_14, %c0_15] : memref<4x64xbf16, #tpu.memory_space<vmem>>, vector<4x64xbf16>
    %cst_16 = arith.constant dense<0.000000e+00> : vector<16x64xf32>
    %16 = tpu.matmul %1, %15, %cst_16 {dimension_numbers = #tpu.dot_dimension_numbers<[1], [0], [0], [1], [0, 0, 1, 1], [], []>} : vector<16x4xbf16>, vector<4x64xbf16>, vector<16x64xf32> -> vector<16x64xf32>
    %17 = arith.addf %14, %16 : vector<16x64xf32>
    %c0_17 = arith.constant 0 : index
    %c0_18 = arith.constant 0 : index
    %18 = vector.load %arg8[%c0_17, %c0_18] : memref<1x64xf32, #tpu.memory_space<vmem>>, vector<1x64xf32>
    %19 = vector.broadcast %18 : vector<1x64xf32> to vector<16x64xf32>
    %20 = arith.addf %17, %19 : vector<16x64xf32>
    %cst_19 = arith.constant 0.000000e+00 : f32
    %21 = vector.broadcast %cst_19 : f32 to vector<16x64xf32>
    %22 = arith.maximumf %20, %21 : vector<16x64xf32>
    %23 = arith.truncf %22 : vector<16x64xf32> to vector<16x64xbf16>
    %c0_20 = arith.constant 0 : index
    %c0_21 = arith.constant 0 : index
    %24 = vector.load %arg9[%c0_20, %c0_21] : memref<64x8xbf16, #tpu.memory_space<vmem>>, vector<64x8xbf16>
    %cst_22 = arith.constant dense<0.000000e+00> : vector<16x8xf32>
    %25 = tpu.matmul %23, %24, %cst_22 {dimension_numbers = #tpu.dot_dimension_numbers<[1], [0], [0], [1], [0, 0, 1, 1], [], []>} : vector<16x64xbf16>, vector<64x8xbf16>, vector<16x8xf32> -> vector<16x8xf32>
    %c0_23 = arith.constant 0 : index
    %c0_24 = arith.constant 0 : index
    %26 = vector.load %arg10[%c0_23, %c0_24] : memref<4x8xbf16, #tpu.memory_space<vmem>>, vector<4x8xbf16>
    %cst_25 = arith.constant dense<0.000000e+00> : vector<16x8xf32>
    %27 = tpu.matmul %1, %26, %cst_25 {dimension_numbers = #tpu.dot_dimension_numbers<[1], [0], [0], [1], [0, 0, 1, 1], [], []>} : vector<16x4xbf16>, vector<4x8xbf16>, vector<16x8xf32> -> vector<16x8xf32>
    %28 = arith.addf %25, %27 : vector<16x8xf32>
    %c0_26 = arith.constant 0 : index
    %c0_27 = arith.constant 0 : index
    %29 = vector.load %arg11[%c0_26, %c0_27] : memref<1x8xf32, #tpu.memory_space<vmem>>, vector<1x8xf32>
    %30 = vector.broadcast %29 : vector<1x8xf32> to vector<16x8xf32>
    %31 = arith.addf %28, %30 : vector<16x8xf32>
    %cst_28 = arith.constant 0.000000e+00 : f32
    %32 = vector.broadcast %cst_28 : f32 to vector<16x8xf32>
    %33 = arith.maximumf %31, %32 : vector<16x8xf32>
    %c0_29 = arith.constant 0 : index
    %c0_30 = arith.constant 0 : index
    %34 = vector.load %arg12[%c0_29, %c0_30] : memref<16x8xf32, #tpu.memory_space<vmem>>, vector<16x8xf32>
    tpu.vector_store %arg12[%c0_29, %c0_30], %33 {strides = array<i32>} : memref<16x8xf32, #tpu.memory_space<vmem>>, vector<16x8xf32>,
    return
  }
  func.func @transform_0(%arg0: i32) -> (i32, i32) {
    %c0_i32 = arith.constant 0 : i32
    %c0_i32_0 = arith.constant 0 : i32
    return %arg0, %c0_i32 : i32, i32
  }
  func.func @transform_1(%arg0: i32) -> (i32, i32) {
    %c0_i32 = arith.constant 0 : i32
    %c0_i32_0 = arith.constant 0 : i32
    return %arg0, %c0_i32 : i32, i32
  }
  func.func @transform_2(%arg0: i32) -> (i32, i32) {
    %c0_i32 = arith.constant 0 : i32
    %c0_i32_0 = arith.constant 0 : i32
    %c0_i32_1 = arith.constant 0 : i32
    return %c0_i32, %c0_i32_0 : i32, i32
  }
  func.func @transform_3(%arg0: i32) -> (i32, i32) {
    %c0_i32 = arith.constant 0 : i32
    %c0_i32_0 = arith.constant 0 : i32
    %c0_i32_1 = arith.constant 0 : i32
    return %c0_i32, %c0_i32_0 : i32, i32
  }
  func.func @transform_4(%arg0: i32) -> (i32, i32) {
    %c0_i32 = arith.constant 0 : i32
    %c0_i32_0 = arith.constant 0 : i32
    %c0_i32_1 = arith.constant 0 : i32
    return %c0_i32, %c0_i32_0 : i32, i32
  }
  func.func @transform_5(%arg0: i32) -> (i32, i32) {
    %c0_i32 = arith.constant 0 : i32
    %c0_i32_0 = arith.constant 0 : i32
    %c0_i32_1 = arith.constant 0 : i32
    return %c0_i32, %c0_i32_0 : i32, i32
  }
  func.func @transform_6(%arg0: i32) -> (i32, i32) {
    %c0_i32 = arith.constant 0 : i32
    %c0_i32_0 = arith.constant 0 : i32
    %c0_i32_1 = arith.constant 0 : i32
    return %c0_i32, %c0_i32_0 : i32, i32
  }
  func.func @transform_7(%arg0: i32) -> (i32, i32) {
    %c0_i32 = arith.constant 0 : i32
    %c0_i32_0 = arith.constant 0 : i32
    %c0_i32_1 = arith.constant 0 : i32
    return %c0_i32, %c0_i32_0 : i32, i32
  }
  func.func @transform_8(%arg0: i32) -> (i32, i32) {
    %c0_i32 = arith.constant 0 : i32
    %c0_i32_0 = arith.constant 0 : i32
    %c0_i32_1 = arith.constant 0 : i32
    return %c0_i32, %c0_i32_0 : i32, i32
  }
  func.func @transform_9(%arg0: i32) -> (i32, i32) {
    %c0_i32 = arith.constant 0 : i32
    %c0_i32_0 = arith.constant 0 : i32
    %c0_i32_1 = arith.constant 0 : i32
    return %c0_i32, %c0_i32_0 : i32, i32
  }
  func.func @transform_10(%arg0: i32) -> (i32, i32) {
    %c0_i32 = arith.constant 0 : i32
    %c0_i32_0 = arith.constant 0 : i32
    %c0_i32_1 = arith.constant 0 : i32
    return %c0_i32, %c0_i32_0 : i32, i32
  }
  func.func @transform_11(%arg0: i32) -> (i32, i32) {
    %c0_i32 = arith.constant 0 : i32
    %c0_i32_0 = arith.constant 0 : i32
    return %arg0, %c0_i32 : i32, i32
  }
}

</mosaic_0001>

<llo_original>
// kernel: _lambda_.1
$region0: #{_lambda_.1}
  #allocation0 [shape = 'u32[]', space=smem, size = 0x4, offset = 0x4, fixed_abs, tag = 'smem constant byte address 0x4 - core index']
  #allocation1 [shape = 'u32[72,128]{1,0:T(1,128)}', space=vmem, size = 0x9000, scoped, tag = 'internal scratch']
  %s0 = inlined_call_operand.vmem [shape: bf16[32,1536], index: 0, kind: input, shape index: {}]
  %s1 = inlined_call_operand.vmem [shape: bf16[32,4], index: 1, kind: input, shape index: {}]
  %s2 = inlined_call_operand.hbm [shape: bf16[1536,256], index: 2, kind: input, shape index: {}]
  %s3 = inlined_call_operand.vmem [shape: bf16[4,256], index: 3, kind: input, shape index: {}]
  %s4 = inlined_call_operand.vmem [shape: f32[1,256], index: 4, kind: input, shape index: {}]
  %s5 = inlined_call_operand.vmem [shape: bf16[256,64], index: 5, kind: input, shape index: {}]
  %s6 = inlined_call_operand.vmem [shape: bf16[4,64], index: 6, kind: input, shape index: {}]
  %s7 = inlined_call_operand.vmem [shape: f32[1,64], index: 7, kind: input, shape index: {}]
  %s8 = inlined_call_operand.vmem [shape: bf16[64,8], index: 8, kind: input, shape index: {}]
  %s9 = inlined_call_operand.vmem [shape: bf16[4,8], index: 9, kind: input, shape index: {}]
  %s10 = inlined_call_operand.vmem [shape: f32[1,8], index: 10, kind: input, shape index: {}]
  %s11 = inlined_call_operand.vmem [shape: f32[32,8], index: 11, kind: output, shape index: {}]
  %s12 = sld [smem:[#allocation0]]
  $region81: #{_lambda_.1} parent=0
    _
  %s14 = ssub.s32 1, %s12
  %s15 = scalar_select 0, %s14, %s12
  $region1: #{_lambda_.1} parent=0
    #allocation2 [shape = 'u8[786432]{0}', space=vmem, size = 0xc0000, scoped, tag = 'input window, operand 2, single buffered']
    #allocation3 [shape = 's32[2]{0}', space=sflag, size = 0x8, scoped, tag = 'scoped memory for _lambda_.1']
    %16 = vsyncpa [#allocation3], 0
    loop: start=0, step=1, limit=4
    $region2: #{_lambda_.1} parent=1 // loop_pre_header
      _
    $region3: #{_lambda_.1} parent=1 // loop_header
      %s18 = sphi 0, %s22
      %p19 = scmp.ge.s32.totalorder %s18, 4
      %s28 = sphi 0, %s30
      %s31 = sphi 0, %s28
      %s32 = sphi 0, %s31
      %s48 = sphi 0, %s32
      %s54 = sphi 0, %s56
      %s57 = sphi 0, %s54
      %s58 = sphi 0, %s57
      %s74 = sphi 0, %s58
      %s78 = sphi 0, %s78
      %s80 = sphi 0, %s78
      %s81 = sphi 0, %s80
      %s95 = sphi 0, %s81
      %s99 = sphi 0, %s99
      %s101 = sphi 0, %s99
      %s102 = sphi 0, %s101
      %s116 = sphi 0, %s102
      %s120 = sphi 0, %s120
      %s122 = sphi 0, %s120
      %s123 = sphi 0, %s122
      %s137 = sphi 0, %s123
      %s141 = sphi 0, %s141
      %s143 = sphi 0, %s141
      %s144 = sphi 0, %s143
      %s158 = sphi 0, %s144
      %s162 = sphi 0, %s162
      %s164 = sphi 0, %s162
      %s165 = sphi 0, %s164
      %s179 = sphi 0, %s165
      %s183 = sphi 0, %s183
      %s185 = sphi 0, %s183
      %s186 = sphi 0, %s185
      %s200 = sphi 0, %s186
      %s204 = sphi 0, %s204
      %s206 = sphi 0, %s204
      %s207 = sphi 0, %s206
      %s221 = sphi 0, %s207
      %s225 = sphi 0, %s225
      %s227 = sphi 0, %s225
      %s228 = sphi 0, %s227
      %s242 = sphi 0, %s228
      %s246 = sphi 0, %s246
      %s248 = sphi 0, %s246
      %s249 = sphi 0, %s248
      %s263 = sphi 0, %s249
      %s269 = sphi 0, %s271
      %s272 = sphi 0, %s269
      %s273 = sphi 0, %s272
      %s289 = sphi 0, %s273
    $region4: #{_lambda_.1} parent=1 // loop_header_branch
      %21 = sbr.rel (%p19) target = $region8
    $region5: #{_lambda_.1} parent=1 // loop_body
      %s23 = ssub.s32 %s18, 1
      %s24 = ssub.s32 %s18, 2
      %s25 = sadd.s32 %s18, 1
      %s26 = ssub.s32 %s18, %s25
      %p27 = scmp.eq.s32.totalorder %s26, 0
      %s29 = sadd.s32 %s28, 1
      %s30 = scalar_select %p27, %s28, %s29
      %p33 = pneg %p27
      %p34 = scmp.eq.s32.totalorder %s18, 1
      %p35 = por %p33, %p34
      %p36 = scmp.ne.s32.totalorder %s28, %s31
      %p37 = scmp.eq.s32.totalorder %s18, 0
      %p38 = por %p36, %p37
      %p39 = scmp.ne.s32.totalorder %s28, %s31
      %p40 = scmp.eq.s32.totalorder %s23, 1
      %p41 = por %p39, %p40
      %p42 = scmp.ne.s32.totalorder %s31, %s32
      %p43 = scmp.eq.s32.totalorder %s23, 0
      %p44 = por %p42, %p43
      %p45 = scmp.ne.s32.totalorder %s31, %s32
      %p46 = scmp.eq.s32.totalorder %s24, 1
      %p47 = por %p45, %p46
      %p49 = scmp.ne.s32.totalorder %s32, %s48
      %p50 = scmp.eq.s32.totalorder %s24, 0
      %p51 = por %p49, %p50
      %s52 = ssub.s32 %s18, %s25
      %p53 = scmp.eq.s32.totalorder %s52, 0
      %s55 = sadd.s32 %s54, 1
      %s56 = scalar_select %p53, %s54, %s55
      %p59 = pneg %p53
      %p60 = scmp.eq.s32.totalorder %s18, 1
      %p61 = por %p59, %p60
      %p62 = scmp.ne.s32.totalorder %s54, %s57
      %p63 = scmp.eq.s32.totalorder %s18, 0
      %p64 = por %p62, %p63
      %p65 = scmp.ne.s32.totalorder %s54, %s57
      %p66 = scmp.eq.s32.totalorder %s23, 1
      %p67 = por %p65, %p66
      %p68 = scmp.ne.s32.totalorder %s57, %s58
      %p69 = scmp.eq.s32.totalorder %s23, 0
      %p70 = por %p68, %p69
      %p71 = scmp.ne.s32.totalorder %s57, %s58
      %p72 = scmp.eq.s32.totalorder %s24, 1
      %p73 = por %p71, %p72
      %p75 = scmp.ne.s32.totalorder %s58, %s74
      %p76 = scmp.eq.s32.totalorder %s24, 0
      %p77 = por %p75, %p76
      %s79 = sadd.s32 %s78, 1
      %p82 = scmp.eq.s32.totalorder %s18, 1
      %p83 = scmp.ne.s32.totalorder %s78, %s80
      %p84 = scmp.eq.s32.totalorder %s18, 0
      %p85 = por %p83, %p84
      %p86 = scmp.ne.s32.totalorder %s78, %s80
      %p87 = scmp.eq.s32.totalorder %s23, 1
      %p88 = por %p86, %p87
      %p89 = scmp.ne.s32.totalorder %s80, %s81
      %p90 = scmp.eq.s32.totalorder %s23, 0
      %p91 = por %p89, %p90
      %p92 = scmp.ne.s32.totalorder %s80, %s81
      %p93 = scmp.eq.s32.totalorder %s24, 1
      %p94 = por %p92, %p93
      %p96 = scmp.ne.s32.totalorder %s81, %s95
      %p97 = scmp.eq.s32.totalorder %s24, 0
      %p98 = por %p96, %p97
      %s100 = sadd.s32 %s99, 1
      %p103 = scmp.eq.s32.totalorder %s18, 1
      %p104 = scmp.ne.s32.totalorder %s99, %s101
      %p105 = scmp.eq.s32.totalorder %s18, 0
      %p106 = por %p104, %p105
      %p107 = scmp.ne.s32.totalorder %s99, %s101
      %p108 = scmp.eq.s32.totalorder %s23, 1
      %p109 = por %p107, %p108
      %p110 = scmp.ne.s32.totalorder %s101, %s102
      %p111 = scmp.eq.s32.totalorder %s23, 0
      %p112 = por %p110, %p111
      %p113 = scmp.ne.s32.totalorder %s101, %s102
      %p114 = scmp.eq.s32.totalorder %s24, 1
      %p115 = por %p113, %p114
      %p117 = scmp.ne.s32.totalorder %s102, %s116
      %p118 = scmp.eq.s32.totalorder %s24, 0
      %p119 = por %p117, %p118
      %s121 = sadd.s32 %s120, 1
      %p124 = scmp.eq.s32.totalorder %s18, 1
      %p125 = scmp.ne.s32.totalorder %s120, %s122
      %p126 = scmp.eq.s32.totalorder %s18, 0
      %p127 = por %p125, %p126
      %p128 = scmp.ne.s32.totalorder %s120, %s122
      %p129 = scmp.eq.s32.totalorder %s23, 1
      %p130 = por %p128, %p129
      %p131 = scmp.ne.s32.totalorder %s122, %s123
      %p132 = scmp.eq.s32.totalorder %s23, 0
      %p133 = por %p131, %p132
      %p134 = scmp.ne.s32.totalorder %s122, %s123
      %p135 = scmp.eq.s32.totalorder %s24, 1
      %p136 = por %p134, %p135
      %p138 = scmp.ne.s32.totalorder %s123, %s137
      %p139 = scmp.eq.s32.totalorder %s24, 0
      %p140 = por %p138, %p139
      %s142 = sadd.s32 %s141, 1
      %p145 = scmp.eq.s32.totalorder %s18, 1
      %p146 = scmp.ne.s32.totalorder %s141, %s143
      %p147 = scmp.eq.s32.totalorder %s18, 0
      %p148 = por %p146, %p147
      %p149 = scmp.ne.s32.totalorder %s141, %s143
      %p150 = scmp.eq.s32.totalorder %s23, 1
      %p151 = por %p149, %p150
      %p152 = scmp.ne.s32.totalorder %s143, %s144
      %p153 = scmp.eq.s32.totalorder %s23, 0
      %p154 = por %p152, %p153
      %p155 = scmp.ne.s32.totalorder %s143, %s144
      %p156 = scmp.eq.s32.totalorder %s24, 1
      %p157 = por %p155, %p156
      %p159 = scmp.ne.s32.totalorder %s144, %s158
      %p160 = scmp.eq.s32.totalorder %s24, 0
      %p161 = por %p159, %p160
      %s163 = sadd.s32 %s162, 1
      %p166 = scmp.eq.s32.totalorder %s18, 1
      %p167 = scmp.ne.s32.totalorder %s162, %s164
      %p168 = scmp.eq.s32.totalorder %s18, 0
      %p169 = por %p167, %p168
      %p170 = scmp.ne.s32.totalorder %s162, %s164
      %p171 = scmp.eq.s32.totalorder %s23, 1
      %p172 = por %p170, %p171
      %p173 = scmp.ne.s32.totalorder %s164, %s165
      %p174 = scmp.eq.s32.totalorder %s23, 0
      %p175 = por %p173, %p174
      %p176 = scmp.ne.s32.totalorder %s164, %s165
      %p177 = scmp.eq.s32.totalorder %s24, 1
      %p178 = por %p176, %p177
      %p180 = scmp.ne.s32.totalorder %s165, %s179
      %p181 = scmp.eq.s32.totalorder %s24, 0
      %p182 = por %p180, %p181
      %s184 = sadd.s32 %s183, 1
      %p187 = scmp.eq.s32.totalorder %s18, 1
      %p188 = scmp.ne.s32.totalorder %s183, %s185
      %p189 = scmp.eq.s32.totalorder %s18, 0
      %p190 = por %p188, %p189
      %p191 = scmp.ne.s32.totalorder %s183, %s185
      %p192 = scmp.eq.s32.totalorder %s23, 1
      %p193 = por %p191, %p192
      %p194 = scmp.ne.s32.totalorder %s185, %s186
      %p195 = scmp.eq.s32.totalorder %s23, 0
      %p196 = por %p194, %p195
      %p197 = scmp.ne.s32.totalorder %s185, %s186
      %p198 = scmp.eq.s32.totalorder %s24, 1
      %p199 = por %p197, %p198
      %p201 = scmp.ne.s32.totalorder %s186, %s200
      %p202 = scmp.eq.s32.totalorder %s24, 0
      %p203 = por %p201, %p202
      %s205 = sadd.s32 %s204, 1
      %p208 = scmp.eq.s32.totalorder %s18, 1
      %p209 = scmp.ne.s32.totalorder %s204, %s206
      %p210 = scmp.eq.s32.totalorder %s18, 0
      %p211 = por %p209, %p210
      %p212 = scmp.ne.s32.totalorder %s204, %s206
      %p213 = scmp.eq.s32.totalorder %s23, 1
      %p214 = por %p212, %p213
      %p215 = scmp.ne.s32.totalorder %s206, %s207
      %p216 = scmp.eq.s32.totalorder %s23, 0
      %p217 = por %p215, %p216
      %p218 = scmp.ne.s32.totalorder %s206, %s207
      %p219 = scmp.eq.s32.totalorder %s24, 1
      %p220 = por %p218, %p219
      %p222 = scmp.ne.s32.totalorder %s207, %s221
      %p223 = scmp.eq.s32.totalorder %s24, 0
      %p224 = por %p222, %p223
      %s226 = sadd.s32 %s225, 1
      %p229 = scmp.eq.s32.totalorder %s18, 1
      %p230 = scmp.ne.s32.totalorder %s225, %s227
      %p231 = scmp.eq.s32.totalorder %s18, 0
      %p232 = por %p230, %p231
      %p233 = scmp.ne.s32.totalorder %s225, %s227
      %p234 = scmp.eq.s32.totalorder %s23, 1
      %p235 = por %p233, %p234
      %p236 = scmp.ne.s32.totalorder %s227, %s228
      %p237 = scmp.eq.s32.totalorder %s23, 0
      %p238 = por %p236, %p237
      %p239 = scmp.ne.s32.totalorder %s227, %s228
      %p240 = scmp.eq.s32.totalorder %s24, 1
      %p241 = por %p239, %p240
      %p243 = scmp.ne.s32.totalorder %s228, %s242
      %p244 = scmp.eq.s32.totalorder %s24, 0
      %p245 = por %p243, %p244
      %s247 = sadd.s32 %s246, 1
      %p250 = scmp.eq.s32.totalorder %s18, 1
      %p251 = scmp.ne.s32.totalorder %s246, %s248
      %p252 = scmp.eq.s32.totalorder %s18, 0
      %p253 = por %p251, %p252
      %p254 = scmp.ne.s32.totalorder %s246, %s248
      %p255 = scmp.eq.s32.totalorder %s23, 1
      %p256 = por %p254, %p255
      %p257 = scmp.ne.s32.totalorder %s248, %s249
      %p258 = scmp.eq.s32.totalorder %s23, 0
      %p259 = por %p257, %p258
      %p260 = scmp.ne.s32.totalorder %s248, %s249
      %p261 = scmp.eq.s32.totalorder %s24, 1
      %p262 = por %p260, %p261
      %p264 = scmp.ne.s32.totalorder %s249, %s263
      %p265 = scmp.eq.s32.totalorder %s24, 0
      %p266 = por %p264, %p265
      %s267 = ssub.s32 %s18, %s25
      %p268 = scmp.eq.s32.totalorder %s267, 0
      %s270 = sadd.s32 %s269, 1
      %s271 = scalar_select %p268, %s269, %s270
      %p274 = pneg %p268
      %p275 = scmp.eq.s32.totalorder %s18, 1
      %p276 = por %p274, %p275
      %p277 = scmp.ne.s32.totalorder %s269, %s272
      %p278 = scmp.eq.s32.totalorder %s18, 0
      %p279 = por %p277, %p278
      %p280 = scmp.ne.s32.totalorder %s269, %s272
      %p281 = scmp.eq.s32.totalorder %s23, 1
      %p282 = por %p280, %p281
      %p283 = scmp.ne.s32.totalorder %s272, %s273
      %p284 = scmp.eq.s32.totalorder %s23, 0
      %p285 = por %p283, %p284
      %p286 = scmp.ne.s32.totalorder %s272, %s273
      %p287 = scmp.eq.s32.totalorder %s24, 1
      %p288 = por %p286, %p287
      %p290 = scmp.ne.s32.totalorder %s273, %s289
      %p291 = scmp.eq.s32.totalorder %s24, 0
      %p292 = por %p290, %p291
      %p293 = scmp.le.s32.totalorder 1, %s18
      %p294 = scmp.lt.s32.totalorder %s18, 3
      %p295 = pnand %p293, %p294
      %p296 = pneg %p295
      // Predicated region
      $region9: #{_lambda_.1} parent=5 // pred_check
        _
      $region10: #{_lambda_.1} parent=5 // pred_check_branch
        %298 = sbr.rel (%p295) target = $region12
      $region11: #{_lambda_.1} parent=5 // pred_region
        %s299 = ssub.s32 %s18, 1
        // Predicated region
        $region13: #{_lambda_.1} parent=11 // pred_check
          %p300 = pneg %p91
        $region14: #{_lambda_.1} parent=11 // pred_check_branch
          %302 = sbr.rel (%p300) target = $region16
        $region15: #{_lambda_.1} parent=11 // pred_region
          %304 = vsyncadd [#allocation3], 0
          %s305 = sshll.u32 %s2, 4
          %s306 = int_to_ptr.hbm [resolvable:$true] %s305
          %s307 = sshll.u32 [#allocation2], 4
          %s308 = int_to_ptr.vmem [resolvable:$true] %s307
          %313 = dma.hbm_to_vmem [thread:$0]  %s306, 24576, %s308, [#allocation3], 128, 128, 8
        $region16: #{_lambda_.1} parent=11 // pred_fallthru
          _
        // Predicated region
        $region17: #{_lambda_.1} parent=11 // pred_check
          %p314 = pneg %p112
        $region18: #{_lambda_.1} parent=11 // pred_check_branch
          %316 = sbr.rel (%p314) target = $region20
        $region19: #{_lambda_.1} parent=11 // pred_region
          _
        $region20: #{_lambda_.1} parent=11 // pred_fallthru
          _
        // Predicated region
        $region21: #{_lambda_.1} parent=11 // pred_check
          %p317 = pneg %p133
        $region22: #{_lambda_.1} parent=11 // pred_check_branch
          %319 = sbr.rel (%p317) target = $region24
        $region23: #{_lambda_.1} parent=11 // pred_region
          _
        $region24: #{_lambda_.1} parent=11 // pred_fallthru
          _
        // Predicated region
        $region25: #{_lambda_.1} parent=11 // pred_check
          %p320 = pneg %p154
        $region26: #{_lambda_.1} parent=11 // pred_check_branch
          %322 = sbr.rel (%p320) target = $region28
        $region27: #{_lambda_.1} parent=11 // pred_region
          _
        $region28: #{_lambda_.1} parent=11 // pred_fallthru
          _
        // Predicated region
        $region29: #{_lambda_.1} parent=11 // pred_check
          %p323 = pneg %p175
        $region30: #{_lambda_.1} parent=11 // pred_check_branch
          %325 = sbr.rel (%p323) target = $region32
        $region31: #{_lambda_.1} parent=11 // pred_region
          _
        $region32: #{_lambda_.1} parent=11 // pred_fallthru
          _
        // Predicated region
        $region33: #{_lambda_.1} parent=11 // pred_check
          %p326 = pneg %p196
        $region34: #{_lambda_.1} parent=11 // pred_check_branch
          %328 = sbr.rel (%p326) target = $region36
        $region35: #{_lambda_.1} parent=11 // pred_region
          _
        $region36: #{_lambda_.1} parent=11 // pred_fallthru
          _
        // Predicated region
        $region37: #{_lambda_.1} parent=11 // pred_check
          %p329 = pneg %p217
        $region38: #{_lambda_.1} parent=11 // pred_check_branch
          %331 = sbr.rel (%p329) target = $region40
        $region39: #{_lambda_.1} parent=11 // pred_region
          _
        $region40: #{_lambda_.1} parent=11 // pred_fallthru
          _
        // Predicated region
        $region41: #{_lambda_.1} parent=11 // pred_check
          %p332 = pneg %p238
        $region42: #{_lambda_.1} parent=11 // pred_check_branch
          %334 = sbr.rel (%p332) target = $region44
        $region43: #{_lambda_.1} parent=11 // pred_region
          _
        $region44: #{_lambda_.1} parent=11 // pred_fallthru
          _
        // Predicated region
        $region45: #{_lambda_.1} parent=11 // pred_check
          %p335 = pneg %p259
        $region46: #{_lambda_.1} parent=11 // pred_check_branch
          %337 = sbr.rel (%p335) target = $region48
        $region47: #{_lambda_.1} parent=11 // pred_region
          _
        $region48: #{_lambda_.1} parent=11 // pred_fallthru
          _
      $region12: #{_lambda_.1} parent=5 // pred_fallthru
        _
      %p338 = scmp.lt.s32.totalorder %s18, 2
      // Predicated region
      $region49: #{_lambda_.1} parent=5 // pred_check
        %p339 = pneg %p338
      $region50: #{_lambda_.1} parent=5 // pred_check_branch
        %341 = sbr.rel (%p339) target = $region52
      $region51: #{_lambda_.1} parent=5 // pred_region
        // Predicated region
        $region53: #{_lambda_.1} parent=51 // pred_check
          %p342 = pneg %p38
        $region54: #{_lambda_.1} parent=51 // pred_check_branch
          %344 = sbr.rel (%p342) target = $region56
        $region55: #{_lambda_.1} parent=51 // pred_region
          %s345 = smul.u32 2, %s18
          %p346 = scmp.lt.s32.totalorder %s345, 3
          %s347 = scalar_select %p346, %s345, 3
          %s348 = smul.addr %s347, 12
          %s349 = smul.addr %s348, 4
          %s350 = scalar_lea.vmem %s0, %s349
          %s351 = smul.u32 2, %s18
        $region56: #{_lambda_.1} parent=51 // pred_fallthru
          _
        // Predicated region
        $region57: #{_lambda_.1} parent=51 // pred_check
          %p352 = pneg %p64
        $region58: #{_lambda_.1} parent=51 // pred_check_branch
          %354 = sbr.rel (%p352) target = $region60
        $region59: #{_lambda_.1} parent=51 // pred_region
          %s355 = smul.u32 2, %s18
          %p356 = scmp.lt.s32.totalorder %s355, 3
          %s357 = scalar_select %p356, %s355, 3
          %s358 = smul.addr %s357, 4
          %s359 = scalar_lea.vmem %s1, %s358
          %s360 = smul.u32 2, %s18
        $region60: #{_lambda_.1} parent=51 // pred_fallthru
          _
      $region52: #{_lambda_.1} parent=5 // pred_fallthru
        _
      %p361 = scmp.le.s32.totalorder 1, %s18
      %p362 = scmp.lt.s32.totalorder %s18, 3
      %p363 = pnand %p361, %p362
      %p364 = pneg %p363
      // Predicated region
      $region61: #{_lambda_.1} parent=5 // pred_check
        _
      $region62: #{_lambda_.1} parent=5 // pred_check_branch
        %366 = sbr.rel (%p363) target = $region64
      $region63: #{_lambda_.1} parent=5 // pred_region
        %s367 = ssub.s32 %s18, 1
        // Predicated region
        $region65: #{_lambda_.1} parent=63 // pred_check
          %p368 = pneg %p91
        $region66: #{_lambda_.1} parent=63 // pred_check_branch
          %370 = sbr.rel (%p368) target = $region68
        $region67: #{_lambda_.1} parent=63 // pred_region
          %372 = dma.done [#allocation3], 24576
        $region68: #{_lambda_.1} parent=63 // pred_fallthru
          _
        %s373 = smul.u32 2, %s23
        %p374 = scmp.lt.s32.totalorder %s373, 3
        %s375 = scalar_select %p374, %s373, 3
        %s376 = smul.addr %s375, 12
        %s377 = smul.addr %s376, 4
        %s378 = scalar_lea.vmem %s0, %s377
        %p379 = pneg %p44
        %p380 = pneg %p41
        %s381 = smul.u32 2, %s23
        %p382 = scmp.lt.s32.totalorder %s381, 3
        %s383 = scalar_select %p382, %s381, 3
        %s384 = smul.addr %s383, 4
        %s385 = scalar_lea.vmem %s1, %s384
        %p386 = pneg %p70
        %p387 = pneg %p67
        %p388 = pneg %p91
        %p389 = pneg %p88
        %p390 = pneg %p112
        %p391 = pneg %p109
        %p392 = pneg %p133
        %p393 = pneg %p130
        %p394 = pneg %p154
        %p395 = pneg %p151
        %p396 = pneg %p175
        %p397 = pneg %p172
        %p398 = pneg %p196
        %p399 = pneg %p193
        %p400 = pneg %p217
        %p401 = pneg %p214
        %p402 = pneg %p238
        %p403 = pneg %p235
        %p404 = pneg %p259
        %p405 = pneg %p256
        %p406 = pneg %p285
        %p407 = pneg %p282
        %s408 = smul.u32 2, %s23
        %p409 = scmp.lt.s32.totalorder %s408, 3
        %s410 = scalar_select %p409, %s408, 3
        %s411 = smul.addr %s410, 8
        %s412 = scalar_lea.vmem %s11, %s411
        %s413 = smul.u32 2, %s23
        %p414 = scmp.lt.s32.totalorder %s413, 3
        %s415 = scalar_select %p414, %s413, 3
        %s416 = smul.addr %s415, 12
        %s417 = smul.addr %s416, 4
        %s418 = scalar_lea.vmem %s0, %s417
        %s419 = smul.u32 2, %s23
        %s420 = smul.u32 2, %s23
        %p421 = scmp.lt.s32.totalorder %s420, 3
        %s422 = scalar_select %p421, %s420, 3
        %s423 = smul.addr %s422, 4
        %s424 = scalar_lea.vmem %s1, %s423
        %s425 = smul.u32 2, %s23
        %s426 = smul.u32 2, %s23
        %p427 = scmp.lt.s32.totalorder %s426, 3
        %s428 = scalar_select %p427, %s426, 3
        %s429 = smul.addr %s428, 8
        %s430 = scalar_lea.vmem %s11, %s429
        %s431 = smul.u32 2, %s23
        %v433 = vld [vmem:[%s418] sm:$0xff]
        %v434 = vld [vmem:[%s418 + $0x8] sm:$0xff]
        %v435 = vld [vmem:[%s418 + $0x10] sm:$0xff]
        %v436 = vld [vmem:[%s418 + $0x18] sm:$0xff]
        %v437 = vld [vmem:[%s418 + $0x20] sm:$0xff]
        %v438 = vld [vmem:[%s418 + $0x28] sm:$0xff]
        %v439 = vld [vmem:[%s418 + $0x30] sm:$0xff]
        %v440 = vld [vmem:[%s418 + $0x38] sm:$0xff]
        %v441 = vld [vmem:[%s418 + $0x40] sm:$0xff]
        %v442 = vld [vmem:[%s418 + $0x48] sm:$0xff]
        %v443 = vld [vmem:[%s418 + $0x50] sm:$0xff]
        %v444 = vld [vmem:[%s418 + $0x58] sm:$0xff]
        %v445 = vld [vmem:[%s424] sm:$0xf]
        %v446 = vld [vmem:[%s424 + $0x4] sm:$0xf]
        %v447 = vld [vmem:[#allocation2] sm:$0xff]
        %v448 = vld [vmem:[#allocation2 + $0x8] sm:$0xff]
        %v449 = vld [vmem:[#allocation2 + $0x10] sm:$0xff]
        %v450 = vld [vmem:[#allocation2 + $0x18] sm:$0xff]
        %v451 = vld [vmem:[#allocation2 + $0x20] sm:$0xff]
        %v452 = vld [vmem:[#allocation2 + $0x28] sm:$0xff]
        %v453 = vld [vmem:[#allocation2 + $0x30] sm:$0xff]
        %v454 = vld [vmem:[#allocation2 + $0x38] sm:$0xff]
        %v455 = vld [vmem:[#allocation2 + $0x40] sm:$0xff]
        %v456 = vld [vmem:[#allocation2 + $0x48] sm:$0xff]
        %v457 = vld [vmem:[#allocation2 + $0x50] sm:$0xff]
        %v458 = vld [vmem:[#allocation2 + $0x58] sm:$0xff]
        %v459 = vld [vmem:[#allocation2 + $0x60] sm:$0xff]
        %v460 = vld [vmem:[#allocation2 + $0x68] sm:$0xff]
        %v461 = vld [vmem:[#allocation2 + $0x70] sm:$0xff]
        %v462 = vld [vmem:[#allocation2 + $0x78] sm:$0xff]
        %v463 = vld [vmem:[#allocation2 + $0x80] sm:$0xff]
        %v464 = vld [vmem:[#allocation2 + $0x88] sm:$0xff]
        %v465 = vld [vmem:[#allocation2 + $0x90] sm:$0xff]
        %v466 = vld [vmem:[#allocation2 + $0x98] sm:$0xff]
        %v467 = vld [vmem:[#allocation2 + $0xa0] sm:$0xff]
        %v468 = vld [vmem:[#allocation2 + $0xa8] sm:$0xff]
        %v469 = vld [vmem:[#allocation2 + $0xb0] sm:$0xff]
        %v470 = vld [vmem:[#allocation2 + $0xb8] sm:$0xff]
        %v471 = vld [vmem:[#allocation2 + $0xc0] sm:$0xff]
        %v472 = vld [vmem:[#allocation2 + $0xc8] sm:$0xff]
        %v473 = vld [vmem:[#allocation2 + $0xd0] sm:$0xff]
        %v474 = vld [vmem:[#allocation2 + $0xd8] sm:$0xff]
        %v475 = vld [vmem:[#allocation2 + $0xe0] sm:$0xff]
        %v476 = vld [vmem:[#allocation2 + $0xe8] sm:$0xff]
        %v477 = vld [vmem:[#allocation2 + $0xf0] sm:$0xff]
        %v478 = vld [vmem:[#allocation2 + $0xf8] sm:$0xff]
        %v479 = vld [vmem:[#allocation2 + $0x100] sm:$0xff]
        %v480 = vld [vmem:[#allocation2 + $0x108] sm:$0xff]
        %v481 = vld [vmem:[#allocation2 + $0x110] sm:$0xff]
        %v482 = vld [vmem:[#allocation2 + $0x118] sm:$0xff]
        %v483 = vld [vmem:[#allocation2 + $0x120] sm:$0xff]
        %v484 = vld [vmem:[#allocation2 + $0x128] sm:$0xff]
        %v485 = vld [vmem:[#allocation2 + $0x130] sm:$0xff]
        %v486 = vld [vmem:[#allocation2 + $0x138] sm:$0xff]
        %v487 = vld [vmem:[#allocation2 + $0x140] sm:$0xff]
        %v488 = vld [vmem:[#allocation2 + $0x148] sm:$0xff]
        %v489 = vld [vmem:[#allocation2 + $0x150] sm:$0xff]
        %v490 = vld [vmem:[#allocation2 + $0x158] sm:$0xff]
        %v491 = vld [vmem:[#allocation2 + $0x160] sm:$0xff]
        %v492 = vld [vmem:[#allocation2 + $0x168] sm:$0xff]
        %v493 = vld [vmem:[#allocation2 + $0x170] sm:$0xff]
        %v494 = vld [vmem:[#allocation2 + $0x178] sm:$0xff]
        %v495 = vld [vmem:[#allocation2 + $0x180] sm:$0xff]
        %v496 = vld [vmem:[#allocation2 + $0x188] sm:$0xff]
        %v497 = vld [vmem:[#allocation2 + $0x190] sm:$0xff]
        %v498 = vld [vmem:[#allocation2 + $0x198] sm:$0xff]
        %v499 = vld [vmem:[#allocation2 + $0x1a0] sm:$0xff]
        %v500 = vld [vmem:[#allocation2 + $0x1a8] sm:$0xff]
        %v501 = vld [vmem:[#allocation2 + $0x1b0] sm:$0xff]
        %v502 = vld [vmem:[#allocation2 + $0x1b8] sm:$0xff]
        %v503 = vld [vmem:[#allocation2 + $0x1c0] sm:$0xff]
        %v504 = vld [vmem:[#allocation2 + $0x1c8] sm:$0xff]
        %v505 = vld [vmem:[#allocation2 + $0x1d0] sm:$0xff]
        %v506 = vld [vmem:[#allocation2 + $0x1d8] sm:$0xff]
        %v507 = vld [vmem:[#allocation2 + $0x1e0] sm:$0xff]
        %v508 = vld [vmem:[#allocation2 + $0x1e8] sm:$0xff]
        %v509 = vld [vmem:[#allocation2 + $0x1f0] sm:$0xff]
        %v510 = vld [vmem:[#allocation2 + $0x1f8] sm:$0xff]
        %v511 = vld [vmem:[#allocation2 + $0x200] sm:$0xff]
        %v512 = vld [vmem:[#allocation2 + $0x208] sm:$0xff]
        %v513 = vld [vmem:[#allocation2 + $0x210] sm:$0xff]
        %v514 = vld [vmem:[#allocation2 + $0x218] sm:$0xff]
        %v515 = vld [vmem:[#allocation2 + $0x220] sm:$0xff]
        %v516 = vld [vmem:[#allocation2 + $0x228] sm:$0xff]
        %v517 = vld [vmem:[#allocation2 + $0x230] sm:$0xff]
        %v518 = vld [vmem:[#allocation2 + $0x238] sm:$0xff]
        %v519 = vld [vmem:[#allocation2 + $0x240] sm:$0xff]
        %v520 = vld [vmem:[#allocation2 + $0x248] sm:$0xff]
        %v521 = vld [vmem:[#allocation2 + $0x250] sm:$0xff]
        %v522 = vld [vmem:[#allocation2 + $0x258] sm:$0xff]
        %v523 = vld [vmem:[#allocation2 + $0x260] sm:$0xff]
        %v524 = vld [vmem:[#allocation2 + $0x268] sm:$0xff]
        %v525 = vld [vmem:[#allocation2 + $0x270] sm:$0xff]
        %v526 = vld [vmem:[#allocation2 + $0x278] sm:$0xff]
        %v527 = vld [vmem:[#allocation2 + $0x280] sm:$0xff]
        %v528 = vld [vmem:[#allocation2 + $0x288] sm:$0xff]
        %v529 = vld [vmem:[#allocation2 + $0x290] sm:$0xff]
        %v530 = vld [vmem:[#allocation2 + $0x298] sm:$0xff]
        %v531 = vld [vmem:[#allocation2 + $0x2a0] sm:$0xff]
        %v532 = vld [vmem:[#allocation2 + $0x2a8] sm:$0xff]
        %v533 = vld [vmem:[#allocation2 + $0x2b0] sm:$0xff]
        %v534 = vld [vmem:[#allocation2 + $0x2b8] sm:$0xff]
        %v535 = vld [vmem:[#allocation2 + $0x2c0] sm:$0xff]
        %v536 = vld [vmem:[#allocation2 + $0x2c8] sm:$0xff]
        %v537 = vld [vmem:[#allocation2 + $0x2d0] sm:$0xff]
        %v538 = vld [vmem:[#allocation2 + $0x2d8] sm:$0xff]
        %v539 = vld [vmem:[#allocation2 + $0x2e0] sm:$0xff]
        %v540 = vld [vmem:[#allocation2 + $0x2e8] sm:$0xff]
        %v541 = vld [vmem:[#allocation2 + $0x2f0] sm:$0xff]
        %v542 = vld [vmem:[#allocation2 + $0x2f8] sm:$0xff]
        %v543 = vld [vmem:[#allocation2 + $0x300] sm:$0xff]
        %v544 = vld [vmem:[#allocation2 + $0x308] sm:$0xff]
        %v545 = vld [vmem:[#allocation2 + $0x310] sm:$0xff]
        %v546 = vld [vmem:[#allocation2 + $0x318] sm:$0xff]
        %v547 = vld [vmem:[#allocation2 + $0x320] sm:$0xff]
        %v548 = vld [vmem:[#allocation2 + $0x328] sm:$0xff]
        %v549 = vld [vmem:[#allocation2 + $0x330] sm:$0xff]
        %v550 = vld [vmem:[#allocation2 + $0x338] sm:$0xff]
        %v551 = vld [vmem:[#allocation2 + $0x340] sm:$0xff]
        %v552 = vld [vmem:[#allocation2 + $0x348] sm:$0xff]
        %v553 = vld [vmem:[#allocation2 + $0x350] sm:$0xff]
        %v554 = vld [vmem:[#allocation2 + $0x358] sm:$0xff]
        %v555 = vld [vmem:[#allocation2 + $0x360] sm:$0xff]
        %v556 = vld [vmem:[#allocation2 + $0x368] sm:$0xff]
        %v557 = vld [vmem:[#allocation2 + $0x370] sm:$0xff]
        %v558 = vld [vmem:[#allocation2 + $0x378] sm:$0xff]
        %v559 = vld [vmem:[#allocation2 + $0x380] sm:$0xff]
        %v560 = vld [vmem:[#allocation2 + $0x388] sm:$0xff]
        %v561 = vld [vmem:[#allocation2 + $0x390] sm:$0xff]
        %v562 = vld [vmem:[#allocation2 + $0x398] sm:$0xff]
        %v563 = vld [vmem:[#allocation2 + $0x3a0] sm:$0xff]
        %v564 = vld [vmem:[#allocation2 + $0x3a8] sm:$0xff]
        %v565 = vld [vmem:[#allocation2 + $0x3b0] sm:$0xff]
        %v566 = vld [vmem:[#allocation2 + $0x3b8] sm:$0xff]
        %v567 = vld [vmem:[#allocation2 + $0x3c0] sm:$0xff]
        %v568 = vld [vmem:[#allocation2 + $0x3c8] sm:$0xff]
        %v569 = vld [vmem:[#allocation2 + $0x3d0] sm:$0xff]
        %v570 = vld [vmem:[#allocation2 + $0x3d8] sm:$0xff]
        %v571 = vld [vmem:[#allocation2 + $0x3e0] sm:$0xff]
        %v572 = vld [vmem:[#allocation2 + $0x3e8] sm:$0xff]
        %v573 = vld [vmem:[#allocation2 + $0x3f0] sm:$0xff]
        %v574 = vld [vmem:[#allocation2 + $0x3f8] sm:$0xff]
        %v575 = vld [vmem:[#allocation2 + $0x400] sm:$0xff]
        %v576 = vld [vmem:[#allocation2 + $0x408] sm:$0xff]
        %v577 = vld [vmem:[#allocation2 + $0x410] sm:$0xff]
        %v578 = vld [vmem:[#allocation2 + $0x418] sm:$0xff]
        %v579 = vld [vmem:[#allocation2 + $0x420] sm:$0xff]
        %v580 = vld [vmem:[#allocation2 + $0x428] sm:$0xff]
        %v581 = vld [vmem:[#allocation2 + $0x430] sm:$0xff]
        %v582 = vld [vmem:[#allocation2 + $0x438] sm:$0xff]
        %v583 = vld [vmem:[#allocation2 + $0x440] sm:$0xff]
        %v584 = vld [vmem:[#allocation2 + $0x448] sm:$0xff]
        %v585 = vld [vmem:[#allocation2 + $0x450] sm:$0xff]
        %v586 = vld [vmem:[#allocation2 + $0x458] sm:$0xff]
        %v587 = vld [vmem:[#allocation2 + $0x460] sm:$0xff]
        %v588 = vld [vmem:[#allocation2 + $0x468] sm:$0xff]
        %v589 = vld [vmem:[#allocation2 + $0x470] sm:$0xff]
        %v590 = vld [vmem:[#allocation2 + $0x478] sm:$0xff]
        %v591 = vld [vmem:[#allocation2 + $0x480] sm:$0xff]
        %v592 = vld [vmem:[#allocation2 + $0x488] sm:$0xff]
        %v593 = vld [vmem:[#allocation2 + $0x490] sm:$0xff]
        %v594 = vld [vmem:[#allocation2 + $0x498] sm:$0xff]
        %v595 = vld [vmem:[#allocation2 + $0x4a0] sm:$0xff]
        %v596 = vld [vmem:[#allocation2 + $0x4a8] sm:$0xff]
        %v597 = vld [vmem:[#allocation2 + $0x4b0] sm:$0xff]
        %v598 = vld [vmem:[#allocation2 + $0x4b8] sm:$0xff]
        %v599 = vld [vmem:[#allocation2 + $0x4c0] sm:$0xff]
        %v600 = vld [vmem:[#allocation2 + $0x4c8] sm:$0xff]
        %v601 = vld [vmem:[#allocation2 + $0x4d0] sm:$0xff]
        %v602 = vld [vmem:[#allocation2 + $0x4d8] sm:$0xff]
        %v603 = vld [vmem:[#allocation2 + $0x4e0] sm:$0xff]
        %v604 = vld [vmem:[#allocation2 + $0x4e8] sm:$0xff]
        %v605 = vld [vmem:[#allocation2 + $0x4f0] sm:$0xff]
        %v606 = vld [vmem:[#allocation2 + $0x4f8] sm:$0xff]
        %v607 = vld [vmem:[#allocation2 + $0x500] sm:$0xff]
        %v608 = vld [vmem:[#allocation2 + $0x508] sm:$0xff]
        %v609 = vld [vmem:[#allocation2 + $0x510] sm:$0xff]
        %v610 = vld [vmem:[#allocation2 + $0x518] sm:$0xff]
        %v611 = vld [vmem:[#allocation2 + $0x520] sm:$0xff]
        %v612 = vld [vmem:[#allocation2 + $0x528] sm:$0xff]
        %v613 = vld [vmem:[#allocation2 + $0x530] sm:$0xff]
        %v614 = vld [vmem:[#allocation2 + $0x538] sm:$0xff]
        %v615 = vld [vmem:[#allocation2 + $0x540] sm:$0xff]
        %v616 = vld [vmem:[#allocation2 + $0x548] sm:$0xff]
        %v617 = vld [vmem:[#allocation2 + $0x550] sm:$0xff]
        %v618 = vld [vmem:[#allocation2 + $0x558] sm:$0xff]
        %v619 = vld [vmem:[#allocation2 + $0x560] sm:$0xff]
        %v620 = vld [vmem:[#allocation2 + $0x568] sm:$0xff]
        %v621 = vld [vmem:[#allocation2 + $0x570] sm:$0xff]
        %v622 = vld [vmem:[#allocation2 + $0x578] sm:$0xff]
        %v623 = vld [vmem:[#allocation2 + $0x580] sm:$0xff]
        %v624 = vld [vmem:[#allocation2 + $0x588] sm:$0xff]
        %v625 = vld [vmem:[#allocation2 + $0x590] sm:$0xff]
        %v626 = vld [vmem:[#allocation2 + $0x598] sm:$0xff]
        %v627 = vld [vmem:[#allocation2 + $0x5a0] sm:$0xff]
        %v628 = vld [vmem:[#allocation2 + $0x5a8] sm:$0xff]
        %v629 = vld [vmem:[#allocation2 + $0x5b0] sm:$0xff]
        %v630 = vld [vmem:[#allocation2 + $0x5b8] sm:$0xff]
        %v631 = vld [vmem:[#allocation2 + $0x5c0] sm:$0xff]
        %v632 = vld [vmem:[#allocation2 + $0x5c8] sm:$0xff]
        %v633 = vld [vmem:[#allocation2 + $0x5d0] sm:$0xff]
        %v634 = vld [vmem:[#allocation2 + $0x5d8] sm:$0xff]
        %v635 = vld [vmem:[#allocation2 + $0x5e0] sm:$0xff]
        %v636 = vld [vmem:[#allocation2 + $0x5e8] sm:$0xff]
        %v637 = vld [vmem:[#allocation2 + $0x5f0] sm:$0xff]
        %v638 = vld [vmem:[#allocation2 + $0x5f8] sm:$0xff]
        %v639 = vld [vmem:[%s3] sm:$0xf]
        %v642 = vunpack.c.l.b16 %v445
        %v643 = vunpack.c.l.b16 %v446
        %v644 = vpack.c.b16 %v643, %v642
        %646 = vst [vmem:[#allocation1] ss:$4 sm:$0xff] %v639
        %v647 = vld.sshfl [vmem:[#allocation1] sm:$0xff pattern:$0x73625140]
        %v648 = vld.sshfl [vmem:[#allocation1 + $0x8] sm:$0xff pattern:$0x73625140]
        %vm649 = vcmask 31744
        %v651 = vsel %vm649, %v644, 0
        %vm653 = vcmask 1041408
        %v654 = vsel %vm653, %v647, 0
        %v656 = vsel %vm653, %v648, 0
        %658 = vmatpush.bf16.msra.mxu0 0
        %659 = vmatpush.bf16.msra.mxu0 0
        %660 = vmatpush.bf16.msra.mxu0 0
        %661 = vmatpush.bf16.msra.mxu0 0
        %662 = vmatpush.bf16.msra.mxu0 0
        %663 = vmatpush.bf16.msra.mxu0 0
        %664 = vmatpush.bf16.msra.mxu0 0
        %665 = vmatpush.bf16.msra.mxu0 %v654
        %666 = vmatmul.bf16.gmra.mxu0 %v651
        %v667 = vpop.f32.mrf.mxu0
        %v668 = vadd.f32 0.0, %v667
        %v669 = vpop.f32.mrf.mxu0
        %v670 = vadd.f32 0.0, %v669
        %671 = vdwg.mxu0
        %672 = vmatpush.bf16.msra.mxu0 0
        %673 = vmatpush.bf16.msra.mxu0 0
        %674 = vmatpush.bf16.msra.mxu0 0
        %675 = vmatpush.bf16.msra.mxu0 0
        %676 = vmatpush.bf16.msra.mxu0 0
        %677 = vmatpush.bf16.msra.mxu0 0
        %678 = vmatpush.bf16.msra.mxu0 0
        %679 = vmatpush.bf16.msra.mxu0 %v656
        %680 = vmatmul.bf16.gmra.mxu0 %v651
        %v681 = vpop.f32.mrf.mxu0
        %v682 = vadd.f32 0.0, %v681
        %v683 = vpop.f32.mrf.mxu0
        %v684 = vadd.f32 0.0, %v683
        %685 = vdwg.mxu0
        %v698 = vunpack.c.l.b16 %v433
        %v699 = vunpack.c.h.b16 %v433
        %v700 = vunpack.c.l.b16 %v434
        %v701 = vunpack.c.h.b16 %v434
        %v702 = vunpack.c.l.b16 %v435
        %v703 = vunpack.c.h.b16 %v435
        %v704 = vunpack.c.l.b16 %v436
        %v705 = vunpack.c.h.b16 %v436
        %v706 = vunpack.c.l.b16 %v437
        %v707 = vunpack.c.h.b16 %v437
        %v708 = vunpack.c.l.b16 %v438
        %v709 = vunpack.c.h.b16 %v438
        %v710 = vunpack.c.l.b16 %v439
        %v711 = vunpack.c.h.b16 %v439
        %v712 = vunpack.c.l.b16 %v440
        %v713 = vunpack.c.h.b16 %v440
        %v714 = vunpack.c.l.b16 %v441
        %v715 = vunpack.c.h.b16 %v441
        %v716 = vunpack.c.l.b16 %v442
        %v717 = vunpack.c.h.b16 %v442
        %v718 = vunpack.c.l.b16 %v443
        %v719 = vunpack.c.h.b16 %v443
        %v720 = vunpack.c.l.b16 %v444
        %v721 = vunpack.c.h.b16 %v444
        %v722 = vpack.c.b16 %v710, %v698
        %v723 = vpack.c.b16 %v711, %v699
        %v724 = vpack.c.b16 %v712, %v700
        %v725 = vpack.c.b16 %v713, %v701
        %v726 = vpack.c.b16 %v714, %v702
        %v727 = vpack.c.b16 %v715, %v703
        %v728 = vpack.c.b16 %v716, %v704
        %v729 = vpack.c.b16 %v717, %v705
        %v730 = vpack.c.b16 %v718, %v706
        %v731 = vpack.c.b16 %v719, %v707
        %v732 = vpack.c.b16 %v720, %v708
        %v733 = vpack.c.b16 %v721, %v709
        %v938 = vunpack.c.l.b16 %v447
        %v939 = vunpack.c.h.b16 %v447
        %v940 = vunpack.c.l.b16 %v448
        %v941 = vunpack.c.h.b16 %v448
        %v942 = vunpack.c.l.b16 %v449
        %v943 = vunpack.c.h.b16 %v449
        %v944 = vunpack.c.l.b16 %v450
        %v945 = vunpack.c.h.b16 %v450
        %v946 = vunpack.c.l.b16 %v451
        %v947 = vunpack.c.h.b16 %v451
        %v948 = vunpack.c.l.b16 %v452
        %v949 = vunpack.c.h.b16 %v452
        %v950 = vunpack.c.l.b16 %v453
        %v951 = vunpack.c.h.b16 %v453
        %v952 = vunpack.c.l.b16 %v454
        %v953 = vunpack.c.h.b16 %v454
        %v954 = vunpack.c.l.b16 %v455
        %v955 = vunpack.c.h.b16 %v455
        %v956 = vunpack.c.l.b16 %v456
        %v957 = vunpack.c.h.b16 %v456
        %v958 = vunpack.c.l.b16 %v457
        %v959 = vunpack.c.h.b16 %v457
        %v960 = vunpack.c.l.b16 %v458
        %v961 = vunpack.c.h.b16 %v458
        %v962 = vunpack.c.l.b16 %v459
        %v963 = vunpack.c.h.b16 %v459
        %v964 = vunpack.c.l.b16 %v460
        %v965 = vunpack.c.h.b16 %v460
        %v966 = vunpack.c.l.b16 %v461
        %v967 = vunpack.c.h.b16 %v461
        %v968 = vunpack.c.l.b16 %v462
        %v969 = vunpack.c.h.b16 %v462
        %v970 = vunpack.c.l.b16 %v463
        %v971 = vunpack.c.h.b16 %v463
        %v972 = vunpack.c.l.b16 %v464
        %v973 = vunpack.c.h.b16 %v464
        %v974 = vunpack.c.l.b16 %v465
        %v975 = vunpack.c.h.b16 %v465
        %v976 = vunpack.c.l.b16 %v466
        %v977 = vunpack.c.h.b16 %v466
        %v978 = vunpack.c.l.b16 %v467
        %v979 = vunpack.c.h.b16 %v467
        %v980 = vunpack.c.l.b16 %v468
        %v981 = vunpack.c.h.b16 %v468
        %v982 = vunpack.c.l.b16 %v469
        %v983 = vunpack.c.h.b16 %v469
        %v984 = vunpack.c.l.b16 %v470
        %v985 = vunpack.c.h.b16 %v470
        %v986 = vunpack.c.l.b16 %v471
        %v987 = vunpack.c.h.b16 %v471
        %v988 = vunpack.c.l.b16 %v472
        %v989 = vunpack.c.h.b16 %v472
        %v990 = vunpack.c.l.b16 %v473
        %v991 = vunpack.c.h.b16 %v473
        %v992 = vunpack.c.l.b16 %v474
        %v993 = vunpack.c.h.b16 %v474
        %v994 = vunpack.c.l.b16 %v475
        %v995 = vunpack.c.h.b16 %v475
        %v996 = vunpack.c.l.b16 %v476
        %v997 = vunpack.c.h.b16 %v476
        %v998 = vunpack.c.l.b16 %v477
        %v999 = vunpack.c.h.b16 %v477
        %v1000 = vunpack.c.l.b16 %v478
        %v1001 = vunpack.c.h.b16 %v478
        %v1002 = vunpack.c.l.b16 %v479
        %v1003 = vunpack.c.h.b16 %v479
        %v1004 = vunpack.c.l.b16 %v480
        %v1005 = vunpack.c.h.b16 %v480
        %v1006 = vunpack.c.l.b16 %v481
        %v1007 = vunpack.c.h.b16 %v481
        %v1008 = vunpack.c.l.b16 %v482
        %v1009 = vunpack.c.h.b16 %v482
        %v1010 = vunpack.c.l.b16 %v483
        %v1011 = vunpack.c.h.b16 %v483
        %v1012 = vunpack.c.l.b16 %v484
        %v1013 = vunpack.c.h.b16 %v484
        %v1014 = vunpack.c.l.b16 %v485
        %v1015 = vunpack.c.h.b16 %v485
        %v1016 = vunpack.c.l.b16 %v486
        %v1017 = vunpack.c.h.b16 %v486
        %v1018 = vunpack.c.l.b16 %v487
        %v1019 = vunpack.c.h.b16 %v487
        %v1020 = vunpack.c.l.b16 %v488
        %v1021 = vunpack.c.h.b16 %v488
        %v1022 = vunpack.c.l.b16 %v489
        %v1023 = vunpack.c.h.b16 %v489
        %v1024 = vunpack.c.l.b16 %v490
        %v1025 = vunpack.c.h.b16 %v490
        %v1026 = vunpack.c.l.b16 %v491
        %v1027 = vunpack.c.h.b16 %v491
        %v1028 = vunpack.c.l.b16 %v492
        %v1029 = vunpack.c.h.b16 %v492
        %v1030 = vunpack.c.l.b16 %v493
        %v1031 = vunpack.c.h.b16 %v493
        %v1032 = vunpack.c.l.b16 %v494
        %v1033 = vunpack.c.h.b16 %v494
        %v1034 = vunpack.c.l.b16 %v495
        %v1035 = vunpack.c.h.b16 %v495
        %v1036 = vunpack.c.l.b16 %v496
        %v1037 = vunpack.c.h.b16 %v496
        %v1038 = vunpack.c.l.b16 %v497
        %v1039 = vunpack.c.h.b16 %v497
        %v1040 = vunpack.c.l.b16 %v498
        %v1041 = vunpack.c.h.b16 %v498
        %v1042 = vunpack.c.l.b16 %v499
        %v1043 = vunpack.c.h.b16 %v499
        %v1044 = vunpack.c.l.b16 %v500
        %v1045 = vunpack.c.h.b16 %v500
        %v1046 = vunpack.c.l.b16 %v501
        %v1047 = vunpack.c.h.b16 %v501
        %v1048 = vunpack.c.l.b16 %v502
        %v1049 = vunpack.c.h.b16 %v502
        %v1050 = vunpack.c.l.b16 %v503
        %v1051 = vunpack.c.h.b16 %v503
        %v1052 = vunpack.c.l.b16 %v504
        %v1053 = vunpack.c.h.b16 %v504
        %v1054 = vunpack.c.l.b16 %v505
        %v1055 = vunpack.c.h.b16 %v505
        %v1056 = vunpack.c.l.b16 %v506
        %v1057 = vunpack.c.h.b16 %v506
        %v1058 = vunpack.c.l.b16 %v507
        %v1059 = vunpack.c.h.b16 %v507
        %v1060 = vunpack.c.l.b16 %v508
        %v1061 = vunpack.c.h.b16 %v508
        %v1062 = vunpack.c.l.b16 %v509
        %v1063 = vunpack.c.h.b16 %v509
        %v1064 = vunpack.c.l.b16 %v510
        %v1065 = vunpack.c.h.b16 %v510
        %v1066 = vunpack.c.l.b16 %v511
        %v1067 = vunpack.c.h.b16 %v511
        %v1068 = vunpack.c.l.b16 %v512
        %v1069 = vunpack.c.h.b16 %v512
        %v1070 = vunpack.c.l.b16 %v513
        %v1071 = vunpack.c.h.b16 %v513
        %v1072 = vunpack.c.l.b16 %v514
        %v1073 = vunpack.c.h.b16 %v514
        %v1074 = vunpack.c.l.b16 %v515
        %v1075 = vunpack.c.h.b16 %v515
        %v1076 = vunpack.c.l.b16 %v516
        %v1077 = vunpack.c.h.b16 %v516
        %v1078 = vunpack.c.l.b16 %v517
        %v1079 = vunpack.c.h.b16 %v517
        %v1080 = vunpack.c.l.b16 %v518
        %v1081 = vunpack.c.h.b16 %v518
        %v1082 = vunpack.c.l.b16 %v519
        %v1083 = vunpack.c.h.b16 %v519
        %v1084 = vunpack.c.l.b16 %v520
        %v1085 = vunpack.c.h.b16 %v520
        %v1086 = vunpack.c.l.b16 %v521
        %v1087 = vunpack.c.h.b16 %v521
        %v1088 = vunpack.c.l.b16 %v522
        %v1089 = vunpack.c.h.b16 %v522
        %v1090 = vunpack.c.l.b16 %v523
        %v1091 = vunpack.c.h.b16 %v523
        %v1092 = vunpack.c.l.b16 %v524
        %v1093 = vunpack.c.h.b16 %v524
        %v1094 = vunpack.c.l.b16 %v525
        %v1095 = vunpack.c.h.b16 %v525
        %v1096 = vunpack.c.l.b16 %v526
        %v1097 = vunpack.c.h.b16 %v526
        %v1098 = vunpack.c.l.b16 %v527
        %v1099 = vunpack.c.h.b16 %v527
        %v1100 = vunpack.c.l.b16 %v528
        %v1101 = vunpack.c.h.b16 %v528
        %v1102 = vunpack.c.l.b16 %v529
        %v1103 = vunpack.c.h.b16 %v529
        %v1104 = vunpack.c.l.b16 %v530
        %v1105 = vunpack.c.h.b16 %v530
        %v1106 = vunpack.c.l.b16 %v531
        %v1107 = vunpack.c.h.b16 %v531
        %v1108 = vunpack.c.l.b16 %v532
        %v1109 = vunpack.c.h.b16 %v532
        %v1110 = vunpack.c.l.b16 %v533
        %v1111 = vunpack.c.h.b16 %v533
        %v1112 = vunpack.c.l.b16 %v534
        %v1113 = vunpack.c.h.b16 %v534
        %v1114 = vunpack.c.l.b16 %v535
        %v1115 = vunpack.c.h.b16 %v535
        %v1116 = vunpack.c.l.b16 %v536
        %v1117 = vunpack.c.h.b16 %v536
        %v1118 = vunpack.c.l.b16 %v537
        %v1119 = vunpack.c.h.b16 %v537
        %v1120 = vunpack.c.l.b16 %v538
        %v1121 = vunpack.c.h.b16 %v538
        %v1122 = vunpack.c.l.b16 %v539
        %v1123 = vunpack.c.h.b16 %v539
        %v1124 = vunpack.c.l.b16 %v540
        %v1125 = vunpack.c.h.b16 %v540
        %v1126 = vunpack.c.l.b16 %v541
        %v1127 = vunpack.c.h.b16 %v541
        %v1128 = vunpack.c.l.b16 %v542
        %v1129 = vunpack.c.h.b16 %v542
        %v1130 = vunpack.c.l.b16 %v543
        %v1131 = vunpack.c.h.b16 %v543
        %v1132 = vunpack.c.l.b16 %v544
        %v1133 = vunpack.c.h.b16 %v544
        %v1134 = vunpack.c.l.b16 %v545
        %v1135 = vunpack.c.h.b16 %v545
        %v1136 = vunpack.c.l.b16 %v546
        %v1137 = vunpack.c.h.b16 %v546
        %v1138 = vunpack.c.l.b16 %v547
        %v1139 = vunpack.c.h.b16 %v547
        %v1140 = vunpack.c.l.b16 %v548
        %v1141 = vunpack.c.h.b16 %v548
        %v1142 = vunpack.c.l.b16 %v549
        %v1143 = vunpack.c.h.b16 %v549
        %v1144 = vunpack.c.l.b16 %v550
        %v1145 = vunpack.c.h.b16 %v550
        %v1146 = vunpack.c.l.b16 %v551
        %v1147 = vunpack.c.h.b16 %v551
        %v1148 = vunpack.c.l.b16 %v552
        %v1149 = vunpack.c.h.b16 %v552
        %v1150 = vunpack.c.l.b16 %v553
        %v1151 = vunpack.c.h.b16 %v553
        %v1152 = vunpack.c.l.b16 %v554
        %v1153 = vunpack.c.h.b16 %v554
        %v1154 = vunpack.c.l.b16 %v555
        %v1155 = vunpack.c.h.b16 %v555
        %v1156 = vunpack.c.l.b16 %v556
        %v1157 = vunpack.c.h.b16 %v556
        %v1158 = vunpack.c.l.b16 %v557
        %v1159 = vunpack.c.h.b16 %v557
        %v1160 = vunpack.c.l.b16 %v558
        %v1161 = vunpack.c.h.b16 %v558
        %v1162 = vunpack.c.l.b16 %v559
        %v1163 = vunpack.c.h.b16 %v559
        %v1164 = vunpack.c.l.b16 %v560
        %v1165 = vunpack.c.h.b16 %v560
        %v1166 = vunpack.c.l.b16 %v561
        %v1167 = vunpack.c.h.b16 %v561
        %v1168 = vunpack.c.l.b16 %v562
        %v1169 = vunpack.c.h.b16 %v562
        %v1170 = vunpack.c.l.b16 %v563
        %v1171 = vunpack.c.h.b16 %v563
        %v1172 = vunpack.c.l.b16 %v564
        %v1173 = vunpack.c.h.b16 %v564
        %v1174 = vunpack.c.l.b16 %v565
        %v1175 = vunpack.c.h.b16 %v565
        %v1176 = vunpack.c.l.b16 %v566
        %v1177 = vunpack.c.h.b16 %v566
        %v1178 = vunpack.c.l.b16 %v567
        %v1179 = vunpack.c.h.b16 %v567
        %v1180 = vunpack.c.l.b16 %v568
        %v1181 = vunpack.c.h.b16 %v568
        %v1182 = vunpack.c.l.b16 %v569
        %v1183 = vunpack.c.h.b16 %v569
        %v1184 = vunpack.c.l.b16 %v570
        %v1185 = vunpack.c.h.b16 %v570
        %v1186 = vunpack.c.l.b16 %v571
        %v1187 = vunpack.c.h.b16 %v571
        %v1188 = vunpack.c.l.b16 %v572
        %v1189 = vunpack.c.h.b16 %v572
        %v1190 = vunpack.c.l.b16 %v573
        %v1191 = vunpack.c.h.b16 %v573
        %v1192 = vunpack.c.l.b16 %v574
        %v1193 = vunpack.c.h.b16 %v574
        %v1194 = vunpack.c.l.b16 %v575
        %v1195 = vunpack.c.h.b16 %v575
        %v1196 = vunpack.c.l.b16 %v576
        %v1197 = vunpack.c.h.b16 %v576
        %v1198 = vunpack.c.l.b16 %v577
        %v1199 = vunpack.c.h.b16 %v577
        %v1200 = vunpack.c.l.b16 %v578
        %v1201 = vunpack.c.h.b16 %v578
        %v1202 = vunpack.c.l.b16 %v579
        %v1203 = vunpack.c.h.b16 %v579
        %v1204 = vunpack.c.l.b16 %v580
        %v1205 = vunpack.c.h.b16 %v580
        %v1206 = vunpack.c.l.b16 %v581
        %v1207 = vunpack.c.h.b16 %v581
        %v1208 = vunpack.c.l.b16 %v582
        %v1209 = vunpack.c.h.b16 %v582
        %v1210 = vunpack.c.l.b16 %v583
        %v1211 = vunpack.c.h.b16 %v583
        %v1212 = vunpack.c.l.b16 %v584
        %v1213 = vunpack.c.h.b16 %v584
        %v1214 = vunpack.c.l.b16 %v585
        %v1215 = vunpack.c.h.b16 %v585
        %v1216 = vunpack.c.l.b16 %v586
        %v1217 = vunpack.c.h.b16 %v586
        %v1218 = vunpack.c.l.b16 %v587
        %v1219 = vunpack.c.h.b16 %v587
        %v1220 = vunpack.c.l.b16 %v588
        %v1221 = vunpack.c.h.b16 %v588
        %v1222 = vunpack.c.l.b16 %v589
        %v1223 = vunpack.c.h.b16 %v589
        %v1224 = vunpack.c.l.b16 %v590
        %v1225 = vunpack.c.h.b16 %v590
        %v1226 = vunpack.c.l.b16 %v591
        %v1227 = vunpack.c.h.b16 %v591
        %v1228 = vunpack.c.l.b16 %v592
        %v1229 = vunpack.c.h.b16 %v592
        %v1230 = vunpack.c.l.b16 %v593
        %v1231 = vunpack.c.h.b16 %v593
        %v1232 = vunpack.c.l.b16 %v594
        %v1233 = vunpack.c.h.b16 %v594
        %v1234 = vunpack.c.l.b16 %v595
        %v1235 = vunpack.c.h.b16 %v595
        %v1236 = vunpack.c.l.b16 %v596
        %v1237 = vunpack.c.h.b16 %v596
        %v1238 = vunpack.c.l.b16 %v597
        %v1239 = vunpack.c.h.b16 %v597
        %v1240 = vunpack.c.l.b16 %v598
        %v1241 = vunpack.c.h.b16 %v598
        %v1242 = vunpack.c.l.b16 %v599
        %v1243 = vunpack.c.h.b16 %v599
        %v1244 = vunpack.c.l.b16 %v600
        %v1245 = vunpack.c.h.b16 %v600
        %v1246 = vunpack.c.l.b16 %v601
        %v1247 = vunpack.c.h.b16 %v601
        %v1248 = vunpack.c.l.b16 %v602
        %v1249 = vunpack.c.h.b16 %v602
        %v1250 = vunpack.c.l.b16 %v603
        %v1251 = vunpack.c.h.b16 %v603
        %v1252 = vunpack.c.l.b16 %v604
        %v1253 = vunpack.c.h.b16 %v604
        %v1254 = vunpack.c.l.b16 %v605
        %v1255 = vunpack.c.h.b16 %v605
        %v1256 = vunpack.c.l.b16 %v606
        %v1257 = vunpack.c.h.b16 %v606
        %v1258 = vunpack.c.l.b16 %v607
        %v1259 = vunpack.c.h.b16 %v607
        %v1260 = vunpack.c.l.b16 %v608
        %v1261 = vunpack.c.h.b16 %v608
        %v1262 = vunpack.c.l.b16 %v609
        %v1263 = vunpack.c.h.b16 %v609
        %v1264 = vunpack.c.l.b16 %v610
        %v1265 = vunpack.c.h.b16 %v610
        %v1266 = vunpack.c.l.b16 %v611
        %v1267 = vunpack.c.h.b16 %v611
        %v1268 = vunpack.c.l.b16 %v612
        %v1269 = vunpack.c.h.b16 %v612
        %v1270 = vunpack.c.l.b16 %v613
        %v1271 = vunpack.c.h.b16 %v613
        %v1272 = vunpack.c.l.b16 %v614
        %v1273 = vunpack.c.h.b16 %v614
        %v1274 = vunpack.c.l.b16 %v615
        %v1275 = vunpack.c.h.b16 %v615
        %v1276 = vunpack.c.l.b16 %v616
        %v1277 = vunpack.c.h.b16 %v616
        %v1278 = vunpack.c.l.b16 %v617
        %v1279 = vunpack.c.h.b16 %v617
        %v1280 = vunpack.c.l.b16 %v618
        %v1281 = vunpack.c.h.b16 %v618
        %v1282 = vunpack.c.l.b16 %v619
        %v1283 = vunpack.c.h.b16 %v619
        %v1284 = vunpack.c.l.b16 %v620
        %v1285 = vunpack.c.h.b16 %v620
        %v1286 = vunpack.c.l.b16 %v621
        %v1287 = vunpack.c.h.b16 %v621
        %v1288 = vunpack.c.l.b16 %v622
        %v1289 = vunpack.c.h.b16 %v622
        %v1290 = vunpack.c.l.b16 %v623
        %v1291 = vunpack.c.h.b16 %v623
        %v1292 = vunpack.c.l.b16 %v624
        %v1293 = vunpack.c.h.b16 %v624
        %v1294 = vunpack.c.l.b16 %v625
        %v1295 = vunpack.c.h.b16 %v625
        %v1296 = vunpack.c.l.b16 %v626
        %v1297 = vunpack.c.h.b16 %v626
        %v1298 = vunpack.c.l.b16 %v627
        %v1299 = vunpack.c.h.b16 %v627
        %v1300 = vunpack.c.l.b16 %v628
        %v1301 = vunpack.c.h.b16 %v628
        %v1302 = vunpack.c.l.b16 %v629
        %v1303 = vunpack.c.h.b16 %v629
        %v1304 = vunpack.c.l.b16 %v630
        %v1305 = vunpack.c.h.b16 %v630
        %v1306 = vunpack.c.l.b16 %v631
        %v1307 = vunpack.c.h.b16 %v631
        %v1308 = vunpack.c.l.b16 %v632
        %v1309 = vunpack.c.h.b16 %v632
        %v1310 = vunpack.c.l.b16 %v633
        %v1311 = vunpack.c.h.b16 %v633
        %v1312 = vunpack.c.l.b16 %v634
        %v1313 = vunpack.c.h.b16 %v634
        %v1314 = vunpack.c.l.b16 %v635
        %v1315 = vunpack.c.h.b16 %v635
        %v1316 = vunpack.c.l.b16 %v636
        %v1317 = vunpack.c.h.b16 %v636
        %v1318 = vunpack.c.l.b16 %v637
        %v1319 = vunpack.c.h.b16 %v637
        %v1320 = vunpack.c.l.b16 %v638
        %v1321 = vunpack.c.h.b16 %v638
        %v1322 = vpack.c.b16 %v940, %v938
        %v1323 = vpack.c.b16 %v941, %v939
        %v1324 = vpack.c.b16 %v944, %v942
        %v1325 = vpack.c.b16 %v945, %v943
        %v1326 = vpack.c.b16 %v948, %v946
        %v1327 = vpack.c.b16 %v949, %v947
        %v1328 = vpack.c.b16 %v952, %v950
        %v1329 = vpack.c.b16 %v953, %v951
        %v1330 = vpack.c.b16 %v956, %v954
        %v1331 = vpack.c.b16 %v957, %v955
        %v1332 = vpack.c.b16 %v960, %v958
        %v1333 = vpack.c.b16 %v961, %v959
        %v1334 = vpack.c.b16 %v964, %v962
        %v1335 = vpack.c.b16 %v965, %v963
        %v1336 = vpack.c.b16 %v968, %v966
        %v1337 = vpack.c.b16 %v969, %v967
        %v1338 = vpack.c.b16 %v972, %v970
        %v1339 = vpack.c.b16 %v973, %v971
        %v1340 = vpack.c.b16 %v976, %v974
        %v1341 = vpack.c.b16 %v977, %v975
        %v1342 = vpack.c.b16 %v980, %v978
        %v1343 = vpack.c.b16 %v981, %v979
        %v1344 = vpack.c.b16 %v984, %v982
        %v1345 = vpack.c.b16 %v985, %v983
        %v1346 = vpack.c.b16 %v988, %v986
        %v1347 = vpack.c.b16 %v989, %v987
        %v1348 = vpack.c.b16 %v992, %v990
        %v1349 = vpack.c.b16 %v993, %v991
        %v1350 = vpack.c.b16 %v996, %v994
        %v1351 = vpack.c.b16 %v997, %v995
        %v1352 = vpack.c.b16 %v1000, %v998
        %v1353 = vpack.c.b16 %v1001, %v999
        %v1354 = vpack.c.b16 %v1004, %v1002
        %v1355 = vpack.c.b16 %v1005, %v1003
        %v1356 = vpack.c.b16 %v1008, %v1006
        %v1357 = vpack.c.b16 %v1009, %v1007
        %v1358 = vpack.c.b16 %v1012, %v1010
        %v1359 = vpack.c.b16 %v1013, %v1011
        %v1360 = vpack.c.b16 %v1016, %v1014
        %v1361 = vpack.c.b16 %v1017, %v1015
        %v1362 = vpack.c.b16 %v1020, %v1018
        %v1363 = vpack.c.b16 %v1021, %v1019
        %v1364 = vpack.c.b16 %v1024, %v1022
        %v1365 = vpack.c.b16 %v1025, %v1023
        %v1366 = vpack.c.b16 %v1028, %v1026
        %v1367 = vpack.c.b16 %v1029, %v1027
        %v1368 = vpack.c.b16 %v1032, %v1030
        %v1369 = vpack.c.b16 %v1033, %v1031
        %v1370 = vpack.c.b16 %v1036, %v1034
        %v1371 = vpack.c.b16 %v1037, %v1035
        %v1372 = vpack.c.b16 %v1040, %v1038
        %v1373 = vpack.c.b16 %v1041, %v1039
        %v1374 = vpack.c.b16 %v1044, %v1042
        %v1375 = vpack.c.b16 %v1045, %v1043
        %v1376 = vpack.c.b16 %v1048, %v1046
        %v1377 = vpack.c.b16 %v1049, %v1047
        %v1378 = vpack.c.b16 %v1052, %v1050
        %v1379 = vpack.c.b16 %v1053, %v1051
        %v1380 = vpack.c.b16 %v1056, %v1054
        %v1381 = vpack.c.b16 %v1057, %v1055
        %v1382 = vpack.c.b16 %v1060, %v1058
        %v1383 = vpack.c.b16 %v1061, %v1059
        %v1384 = vpack.c.b16 %v1064, %v1062
        %v1385 = vpack.c.b16 %v1065, %v1063
        %v1386 = vpack.c.b16 %v1068, %v1066
        %v1387 = vpack.c.b16 %v1069, %v1067
        %v1388 = vpack.c.b16 %v1072, %v1070
        %v1389 = vpack.c.b16 %v1073, %v1071
        %v1390 = vpack.c.b16 %v1076, %v1074
        %v1391 = vpack.c.b16 %v1077, %v1075
        %v1392 = vpack.c.b16 %v1080, %v1078
        %v1393 = vpack.c.b16 %v1081, %v1079
        %v1394 = vpack.c.b16 %v1084, %v1082
        %v1395 = vpack.c.b16 %v1085, %v1083
        %v1396 = vpack.c.b16 %v1088, %v1086
        %v1397 = vpack.c.b16 %v1089, %v1087
        %v1398 = vpack.c.b16 %v1092, %v1090
        %v1399 = vpack.c.b16 %v1093, %v1091
        %v1400 = vpack.c.b16 %v1096, %v1094
        %v1401 = vpack.c.b16 %v1097, %v1095
        %v1402 = vpack.c.b16 %v1100, %v1098
        %v1403 = vpack.c.b16 %v1101, %v1099
        %v1404 = vpack.c.b16 %v1104, %v1102
        %v1405 = vpack.c.b16 %v1105, %v1103
        %v1406 = vpack.c.b16 %v1108, %v1106
        %v1407 = vpack.c.b16 %v1109, %v1107
        %v1408 = vpack.c.b16 %v1112, %v1110
        %v1409 = vpack.c.b16 %v1113, %v1111
        %v1410 = vpack.c.b16 %v1116, %v1114
        %v1411 = vpack.c.b16 %v1117, %v1115
        %v1412 = vpack.c.b16 %v1120, %v1118
        %v1413 = vpack.c.b16 %v1121, %v1119
        %v1414 = vpack.c.b16 %v1124, %v1122
        %v1415 = vpack.c.b16 %v1125, %v1123
        %v1416 = vpack.c.b16 %v1128, %v1126
        %v1417 = vpack.c.b16 %v1129, %v1127
        %v1418 = vpack.c.b16 %v1132, %v1130
        %v1419 = vpack.c.b16 %v1133, %v1131
        %v1420 = vpack.c.b16 %v1136, %v1134
        %v1421 = vpack.c.b16 %v1137, %v1135
        %v1422 = vpack.c.b16 %v1140, %v1138
        %v1423 = vpack.c.b16 %v1141, %v1139
        %v1424 = vpack.c.b16 %v1144, %v1142
        %v1425 = vpack.c.b16 %v1145, %v1143
        %v1426 = vpack.c.b16 %v1148, %v1146
        %v1427 = vpack.c.b16 %v1149, %v1147
        %v1428 = vpack.c.b16 %v1152, %v1150
        %v1429 = vpack.c.b16 %v1153, %v1151
        %v1430 = vpack.c.b16 %v1156, %v1154
        %v1431 = vpack.c.b16 %v1157, %v1155
        %v1432 = vpack.c.b16 %v1160, %v1158
        %v1433 = vpack.c.b16 %v1161, %v1159
        %v1434 = vpack.c.b16 %v1164, %v1162
        %v1435 = vpack.c.b16 %v1165, %v1163
        %v1436 = vpack.c.b16 %v1168, %v1166
        %v1437 = vpack.c.b16 %v1169, %v1167
        %v1438 = vpack.c.b16 %v1172, %v1170
        %v1439 = vpack.c.b16 %v1173, %v1171
        %v1440 = vpack.c.b16 %v1176, %v1174
        %v1441 = vpack.c.b16 %v1177, %v1175
        %v1442 = vpack.c.b16 %v1180, %v1178
        %v1443 = vpack.c.b16 %v1181, %v1179
        %v1444 = vpack.c.b16 %v1184, %v1182
        %v1445 = vpack.c.b16 %v1185, %v1183
        %v1446 = vpack.c.b16 %v1188, %v1186
        %v1447 = vpack.c.b16 %v1189, %v1187
        %v1448 = vpack.c.b16 %v1192, %v1190
        %v1449 = vpack.c.b16 %v1193, %v1191
        %v1450 = vpack.c.b16 %v1196, %v1194
        %v1451 = vpack.c.b16 %v1197, %v1195
        %v1452 = vpack.c.b16 %v1200, %v1198
        %v1453 = vpack.c.b16 %v1201, %v1199
        %v1454 = vpack.c.b16 %v1204, %v1202
        %v1455 = vpack.c.b16 %v1205, %v1203
        %v1456 = vpack.c.b16 %v1208, %v1206
        %v1457 = vpack.c.b16 %v1209, %v1207
        %v1458 = vpack.c.b16 %v1212, %v1210
        %v1459 = vpack.c.b16 %v1213, %v1211
        %v1460 = vpack.c.b16 %v1216, %v1214
        %v1461 = vpack.c.b16 %v1217, %v1215
        %v1462 = vpack.c.b16 %v1220, %v1218
        %v1463 = vpack.c.b16 %v1221, %v1219
        %v1464 = vpack.c.b16 %v1224, %v1222
        %v1465 = vpack.c.b16 %v1225, %v1223
        %v1466 = vpack.c.b16 %v1228, %v1226
        %v1467 = vpack.c.b16 %v1229, %v1227
        %v1468 = vpack.c.b16 %v1232, %v1230
        %v1469 = vpack.c.b16 %v1233, %v1231
        %v1470 = vpack.c.b16 %v1236, %v1234
        %v1471 = vpack.c.b16 %v1237, %v1235
        %v1472 = vpack.c.b16 %v1240, %v1238
        %v1473 = vpack.c.b16 %v1241, %v1239
        %v1474 = vpack.c.b16 %v1244, %v1242
        %v1475 = vpack.c.b16 %v1245, %v1243
        %v1476 = vpack.c.b16 %v1248, %v1246
        %v1477 = vpack.c.b16 %v1249, %v1247
        %v1478 = vpack.c.b16 %v1252, %v1250
        %v1479 = vpack.c.b16 %v1253, %v1251
        %v1480 = vpack.c.b16 %v1256, %v1254
        %v1481 = vpack.c.b16 %v1257, %v1255
        %v1482 = vpack.c.b16 %v1260, %v1258
        %v1483 = vpack.c.b16 %v1261, %v1259
        %v1484 = vpack.c.b16 %v1264, %v1262
        %v1485 = vpack.c.b16 %v1265, %v1263
        %v1486 = vpack.c.b16 %v1268, %v1266
        %v1487 = vpack.c.b16 %v1269, %v1267
        %v1488 = vpack.c.b16 %v1272, %v1270
        %v1489 = vpack.c.b16 %v1273, %v1271
        %v1490 = vpack.c.b16 %v1276, %v1274
        %v1491 = vpack.c.b16 %v1277, %v1275
        %v1492 = vpack.c.b16 %v1280, %v1278
        %v1493 = vpack.c.b16 %v1281, %v1279
        %v1494 = vpack.c.b16 %v1284, %v1282
        %v1495 = vpack.c.b16 %v1285, %v1283
        %v1496 = vpack.c.b16 %v1288, %v1286
        %v1497 = vpack.c.b16 %v1289, %v1287
        %v1498 = vpack.c.b16 %v1292, %v1290
        %v1499 = vpack.c.b16 %v1293, %v1291
        %v1500 = vpack.c.b16 %v1296, %v1294
        %v1501 = vpack.c.b16 %v1297, %v1295
        %v1502 = vpack.c.b16 %v1300, %v1298
        %v1503 = vpack.c.b16 %v1301, %v1299
        %v1504 = vpack.c.b16 %v1304, %v1302
        %v1505 = vpack.c.b16 %v1305, %v1303
        %v1506 = vpack.c.b16 %v1308, %v1306
        %v1507 = vpack.c.b16 %v1309, %v1307
        %v1508 = vpack.c.b16 %v1312, %v1310
        %v1509 = vpack.c.b16 %v1313, %v1311
        %v1510 = vpack.c.b16 %v1316, %v1314
        %v1511 = vpack.c.b16 %v1317, %v1315
        %v1512 = vpack.c.b16 %v1320, %v1318
        %v1513 = vpack.c.b16 %v1321, %v1319
        %1706 = vmatpush.bf16.msra.mxu0 %v1336
        %1707 = vmatpush.bf16.msra.mxu0 %v1334
        %1708 = vmatpush.bf16.msra.mxu0 %v1332
        %1709 = vmatpush.bf16.msra.mxu0 %v1330
        %1710 = vmatpush.bf16.msra.mxu0 %v1328
        %1711 = vmatpush.bf16.msra.mxu0 %v1326
        %1712 = vmatpush.bf16.msra.mxu0 %v1324
        %1713 = vmatpush.bf16.msra.mxu0 %v1322
        %1714 = vmatmul.bf16.gmra.mxu0 %v722
        %v1715 = vpop.f32.mrf.mxu0
        %v1716 = vadd.f32 %v668, %v1715
        %v1717 = vpop.f32.mrf.mxu0
        %v1718 = vadd.f32 %v670, %v1717
        %1719 = vdwg.mxu0
        %1720 = vmatpush.bf16.msra.mxu0 %v1352
        %1721 = vmatpush.bf16.msra.mxu0 %v1350
        %1722 = vmatpush.bf16.msra.mxu0 %v1348
        %1723 = vmatpush.bf16.msra.mxu0 %v1346
        %1724 = vmatpush.bf16.msra.mxu0 %v1344
        %1725 = vmatpush.bf16.msra.mxu0 %v1342
        %1726 = vmatpush.bf16.msra.mxu0 %v1340
        %1727 = vmatpush.bf16.msra.mxu0 %v1338
        %1728 = vmatmul.bf16.gmra.mxu0 %v723
        %v1729 = vpop.f32.mrf.mxu0
        %v1730 = vadd.f32 %v1716, %v1729
        %v1731 = vpop.f32.mrf.mxu0
        %v1732 = vadd.f32 %v1718, %v1731
        %1733 = vdwg.mxu0
        %1734 = vmatpush.bf16.msra.mxu0 %v1368
        %1735 = vmatpush.bf16.msra.mxu0 %v1366
        %1736 = vmatpush.bf16.msra.mxu0 %v1364
        %1737 = vmatpush.bf16.msra.mxu0 %v1362
        %1738 = vmatpush.bf16.msra.mxu0 %v1360
        %1739 = vmatpush.bf16.msra.mxu0 %v1358
        %1740 = vmatpush.bf16.msra.mxu0 %v1356
        %1741 = vmatpush.bf16.msra.mxu0 %v1354
        %1742 = vmatmul.bf16.gmra.mxu0 %v724
        %v1743 = vpop.f32.mrf.mxu0
        %v1744 = vadd.f32 %v1730, %v1743
        %v1745 = vpop.f32.mrf.mxu0
        %v1746 = vadd.f32 %v1732, %v1745
        %1747 = vdwg.mxu0
        %1748 = vmatpush.bf16.msra.mxu0 %v1384
        %1749 = vmatpush.bf16.msra.mxu0 %v1382
        %1750 = vmatpush.bf16.msra.mxu0 %v1380
        %1751 = vmatpush.bf16.msra.mxu0 %v1378
        %1752 = vmatpush.bf16.msra.mxu0 %v1376
        %1753 = vmatpush.bf16.msra.mxu0 %v1374
        %1754 = vmatpush.bf16.msra.mxu0 %v1372
        %1755 = vmatpush.bf16.msra.mxu0 %v1370
        %1756 = vmatmul.bf16.gmra.mxu0 %v725
        %v1757 = vpop.f32.mrf.mxu0
        %v1758 = vadd.f32 %v1744, %v1757
        %v1759 = vpop.f32.mrf.mxu0
        %v1760 = vadd.f32 %v1746, %v1759
        %1761 = vdwg.mxu0
        %1762 = vmatpush.bf16.msra.mxu0 %v1400
        %1763 = vmatpush.bf16.msra.mxu0 %v1398
        %1764 = vmatpush.bf16.msra.mxu0 %v1396
        %1765 = vmatpush.bf16.msra.mxu0 %v1394
        %1766 = vmatpush.bf16.msra.mxu0 %v1392
        %1767 = vmatpush.bf16.msra.mxu0 %v1390
        %1768 = vmatpush.bf16.msra.mxu0 %v1388
        %1769 = vmatpush.bf16.msra.mxu0 %v1386
        %1770 = vmatmul.bf16.gmra.mxu0 %v726
        %v1771 = vpop.f32.mrf.mxu0
        %v1772 = vadd.f32 %v1758, %v1771
        %v1773 = vpop.f32.mrf.mxu0
        %v1774 = vadd.f32 %v1760, %v1773
        %1775 = vdwg.mxu0
        %1776 = vmatpush.bf16.msra.mxu0 %v1416
        %1777 = vmatpush.bf16.msra.mxu0 %v1414
        %1778 = vmatpush.bf16.msra.mxu0 %v1412
        %1779 = vmatpush.bf16.msra.mxu0 %v1410
        %1780 = vmatpush.bf16.msra.mxu0 %v1408
        %1781 = vmatpush.bf16.msra.mxu0 %v1406
        %1782 = vmatpush.bf16.msra.mxu0 %v1404
        %1783 = vmatpush.bf16.msra.mxu0 %v1402
        %1784 = vmatmul.bf16.gmra.mxu0 %v727
        %v1785 = vpop.f32.mrf.mxu0
        %v1786 = vadd.f32 %v1772, %v1785
        %v1787 = vpop.f32.mrf.mxu0
        %v1788 = vadd.f32 %v1774, %v1787
        %1789 = vdwg.mxu0
        %1790 = vmatpush.bf16.msra.mxu0 %v1432
        %1791 = vmatpush.bf16.msra.mxu0 %v1430
        %1792 = vmatpush.bf16.msra.mxu0 %v1428
        %1793 = vmatpush.bf16.msra.mxu0 %v1426
        %1794 = vmatpush.bf16.msra.mxu0 %v1424
        %1795 = vmatpush.bf16.msra.mxu0 %v1422
        %1796 = vmatpush.bf16.msra.mxu0 %v1420
        %1797 = vmatpush.bf16.msra.mxu0 %v1418
        %1798 = vmatmul.bf16.gmra.mxu0 %v728
        %v1799 = vpop.f32.mrf.mxu0
        %v1800 = vadd.f32 %v1786, %v1799
        %v1801 = vpop.f32.mrf.mxu0
        %v1802 = vadd.f32 %v1788, %v1801
        %1803 = vdwg.mxu0
        %1804 = vmatpush.bf16.msra.mxu0 %v1448
        %1805 = vmatpush.bf16.msra.mxu0 %v1446
        %1806 = vmatpush.bf16.msra.mxu0 %v1444
        %1807 = vmatpush.bf16.msra.mxu0 %v1442
        %1808 = vmatpush.bf16.msra.mxu0 %v1440
        %1809 = vmatpush.bf16.msra.mxu0 %v1438
        %1810 = vmatpush.bf16.msra.mxu0 %v1436
        %1811 = vmatpush.bf16.msra.mxu0 %v1434
        %1812 = vmatmul.bf16.gmra.mxu0 %v729
        %v1813 = vpop.f32.mrf.mxu0
        %v1814 = vadd.f32 %v1800, %v1813
        %v1815 = vpop.f32.mrf.mxu0
        %v1816 = vadd.f32 %v1802, %v1815
        %1817 = vdwg.mxu0
        %1818 = vmatpush.bf16.msra.mxu0 %v1464
        %1819 = vmatpush.bf16.msra.mxu0 %v1462
        %1820 = vmatpush.bf16.msra.mxu0 %v1460
        %1821 = vmatpush.bf16.msra.mxu0 %v1458
        %1822 = vmatpush.bf16.msra.mxu0 %v1456
        %1823 = vmatpush.bf16.msra.mxu0 %v1454
        %1824 = vmatpush.bf16.msra.mxu0 %v1452
        %1825 = vmatpush.bf16.msra.mxu0 %v1450
        %1826 = vmatmul.bf16.gmra.mxu0 %v730
        %v1827 = vpop.f32.mrf.mxu0
        %v1828 = vadd.f32 %v1814, %v1827
        %v1829 = vpop.f32.mrf.mxu0
        %v1830 = vadd.f32 %v1816, %v1829
        %1831 = vdwg.mxu0
        %1832 = vmatpush.bf16.msra.mxu0 %v1480
        %1833 = vmatpush.bf16.msra.mxu0 %v1478
        %1834 = vmatpush.bf16.msra.mxu0 %v1476
        %1835 = vmatpush.bf16.msra.mxu0 %v1474
        %1836 = vmatpush.bf16.msra.mxu0 %v1472
        %1837 = vmatpush.bf16.msra.mxu0 %v1470
        %1838 = vmatpush.bf16.msra.mxu0 %v1468
        %1839 = vmatpush.bf16.msra.mxu0 %v1466
        %1840 = vmatmul.bf16.gmra.mxu0 %v731
        %v1841 = vpop.f32.mrf.mxu0
        %v1842 = vadd.f32 %v1828, %v1841
        %v1843 = vpop.f32.mrf.mxu0
        %v1844 = vadd.f32 %v1830, %v1843
        %1845 = vdwg.mxu0
        %1846 = vmatpush.bf16.msra.mxu0 %v1496
        %1847 = vmatpush.bf16.msra.mxu0 %v1494
        %1848 = vmatpush.bf16.msra.mxu0 %v1492
        %1849 = vmatpush.bf16.msra.mxu0 %v1490
        %1850 = vmatpush.bf16.msra.mxu0 %v1488
        %1851 = vmatpush.bf16.msra.mxu0 %v1486
        %1852 = vmatpush.bf16.msra.mxu0 %v1484
        %1853 = vmatpush.bf16.msra.mxu0 %v1482
        %1854 = vmatmul.bf16.gmra.mxu0 %v732
        %v1855 = vpop.f32.mrf.mxu0
        %v1856 = vadd.f32 %v1842, %v1855
        %v1857 = vpop.f32.mrf.mxu0
        %v1858 = vadd.f32 %v1844, %v1857
        %1859 = vdwg.mxu0
        %1860 = vmatpush.bf16.msra.mxu0 %v1512
        %1861 = vmatpush.bf16.msra.mxu0 %v1510
        %1862 = vmatpush.bf16.msra.mxu0 %v1508
        %1863 = vmatpush.bf16.msra.mxu0 %v1506
        %1864 = vmatpush.bf16.msra.mxu0 %v1504
        %1865 = vmatpush.bf16.msra.mxu0 %v1502
        %1866 = vmatpush.bf16.msra.mxu0 %v1500
        %1867 = vmatpush.bf16.msra.mxu0 %v1498
        %1868 = vmatmul.bf16.gmra.mxu0 %v733
        %v1869 = vpop.f32.mrf.mxu0
        %v1870 = vadd.f32 %v1856, %v1869
        %v1871 = vpop.f32.mrf.mxu0
        %v1872 = vadd.f32 %v1858, %v1871
        %1873 = vdwg.mxu0
        %1874 = vmatpush.bf16.msra.mxu0 %v1337
        %1875 = vmatpush.bf16.msra.mxu0 %v1335
        %1876 = vmatpush.bf16.msra.mxu0 %v1333
        %1877 = vmatpush.bf16.msra.mxu0 %v1331
        %1878 = vmatpush.bf16.msra.mxu0 %v1329
        %1879 = vmatpush.bf16.msra.mxu0 %v1327
        %1880 = vmatpush.bf16.msra.mxu0 %v1325
        %1881 = vmatpush.bf16.msra.mxu0 %v1323
        %1882 = vmatmul.bf16.gmra.mxu0 %v722
        %v1883 = vpop.f32.mrf.mxu0
        %v1884 = vadd.f32 %v682, %v1883
        %v1885 = vpop.f32.mrf.mxu0
        %v1886 = vadd.f32 %v684, %v1885
        %1887 = vdwg.mxu0
        %1888 = vmatpush.bf16.msra.mxu0 %v1353
        %1889 = vmatpush.bf16.msra.mxu0 %v1351
        %1890 = vmatpush.bf16.msra.mxu0 %v1349
        %1891 = vmatpush.bf16.msra.mxu0 %v1347
        %1892 = vmatpush.bf16.msra.mxu0 %v1345
        %1893 = vmatpush.bf16.msra.mxu0 %v1343
        %1894 = vmatpush.bf16.msra.mxu0 %v1341
        %1895 = vmatpush.bf16.msra.mxu0 %v1339
        %1896 = vmatmul.bf16.gmra.mxu0 %v723
        %v1897 = vpop.f32.mrf.mxu0
        %v1898 = vadd.f32 %v1884, %v1897
        %v1899 = vpop.f32.mrf.mxu0
        %v1900 = vadd.f32 %v1886, %v1899
        %1901 = vdwg.mxu0
        %1902 = vmatpush.bf16.msra.mxu0 %v1369
        %1903 = vmatpush.bf16.msra.mxu0 %v1367
        %1904 = vmatpush.bf16.msra.mxu0 %v1365
        %1905 = vmatpush.bf16.msra.mxu0 %v1363
        %1906 = vmatpush.bf16.msra.mxu0 %v1361
        %1907 = vmatpush.bf16.msra.mxu0 %v1359
        %1908 = vmatpush.bf16.msra.mxu0 %v1357
        %1909 = vmatpush.bf16.msra.mxu0 %v1355
        %1910 = vmatmul.bf16.gmra.mxu0 %v724
        %v1911 = vpop.f32.mrf.mxu0
        %v1912 = vadd.f32 %v1898, %v1911
        %v1913 = vpop.f32.mrf.mxu0
        %v1914 = vadd.f32 %v1900, %v1913
        %1915 = vdwg.mxu0
        %1916 = vmatpush.bf16.msra.mxu0 %v1385
        %1917 = vmatpush.bf16.msra.mxu0 %v1383
        %1918 = vmatpush.bf16.msra.mxu0 %v1381
        %1919 = vmatpush.bf16.msra.mxu0 %v1379
        %1920 = vmatpush.bf16.msra.mxu0 %v1377
        %1921 = vmatpush.bf16.msra.mxu0 %v1375
        %1922 = vmatpush.bf16.msra.mxu0 %v1373
        %1923 = vmatpush.bf16.msra.mxu0 %v1371
        %1924 = vmatmul.bf16.gmra.mxu0 %v725
        %v1925 = vpop.f32.mrf.mxu0
        %v1926 = vadd.f32 %v1912, %v1925
        %v1927 = vpop.f32.mrf.mxu0
        %v1928 = vadd.f32 %v1914, %v1927
        %1929 = vdwg.mxu0
        %1930 = vmatpush.bf16.msra.mxu0 %v1401
        %1931 = vmatpush.bf16.msra.mxu0 %v1399
        %1932 = vmatpush.bf16.msra.mxu0 %v1397
        %1933 = vmatpush.bf16.msra.mxu0 %v1395
        %1934 = vmatpush.bf16.msra.mxu0 %v1393
        %1935 = vmatpush.bf16.msra.mxu0 %v1391
        %1936 = vmatpush.bf16.msra.mxu0 %v1389
        %1937 = vmatpush.bf16.msra.mxu0 %v1387
        %1938 = vmatmul.bf16.gmra.mxu0 %v726
        %v1939 = vpop.f32.mrf.mxu0
        %v1940 = vadd.f32 %v1926, %v1939
        %v1941 = vpop.f32.mrf.mxu0
        %v1942 = vadd.f32 %v1928, %v1941
        %1943 = vdwg.mxu0
        %1944 = vmatpush.bf16.msra.mxu0 %v1417
        %1945 = vmatpush.bf16.msra.mxu0 %v1415
        %1946 = vmatpush.bf16.msra.mxu0 %v1413
        %1947 = vmatpush.bf16.msra.mxu0 %v1411
        %1948 = vmatpush.bf16.msra.mxu0 %v1409
        %1949 = vmatpush.bf16.msra.mxu0 %v1407
        %1950 = vmatpush.bf16.msra.mxu0 %v1405
        %1951 = vmatpush.bf16.msra.mxu0 %v1403
        %1952 = vmatmul.bf16.gmra.mxu0 %v727
        %v1953 = vpop.f32.mrf.mxu0
        %v1954 = vadd.f32 %v1940, %v1953
        %v1955 = vpop.f32.mrf.mxu0
        %v1956 = vadd.f32 %v1942, %v1955
        %1957 = vdwg.mxu0
        %1958 = vmatpush.bf16.msra.mxu0 %v1433
        %1959 = vmatpush.bf16.msra.mxu0 %v1431
        %1960 = vmatpush.bf16.msra.mxu0 %v1429
        %1961 = vmatpush.bf16.msra.mxu0 %v1427
        %1962 = vmatpush.bf16.msra.mxu0 %v1425
        %1963 = vmatpush.bf16.msra.mxu0 %v1423
        %1964 = vmatpush.bf16.msra.mxu0 %v1421
        %1965 = vmatpush.bf16.msra.mxu0 %v1419
        %1966 = vmatmul.bf16.gmra.mxu0 %v728
        %v1967 = vpop.f32.mrf.mxu0
        %v1968 = vadd.f32 %v1954, %v1967
        %v1969 = vpop.f32.mrf.mxu0
        %v1970 = vadd.f32 %v1956, %v1969
        %1971 = vdwg.mxu0
        %1972 = vmatpush.bf16.msra.mxu0 %v1449
        %1973 = vmatpush.bf16.msra.mxu0 %v1447
        %1974 = vmatpush.bf16.msra.mxu0 %v1445
        %1975 = vmatpush.bf16.msra.mxu0 %v1443
        %1976 = vmatpush.bf16.msra.mxu0 %v1441
        %1977 = vmatpush.bf16.msra.mxu0 %v1439
        %1978 = vmatpush.bf16.msra.mxu0 %v1437
        %1979 = vmatpush.bf16.msra.mxu0 %v1435
        %1980 = vmatmul.bf16.gmra.mxu0 %v729
        %v1981 = vpop.f32.mrf.mxu0
        %v1982 = vadd.f32 %v1968, %v1981
        %v1983 = vpop.f32.mrf.mxu0
        %v1984 = vadd.f32 %v1970, %v1983
        %1985 = vdwg.mxu0
        %1986 = vmatpush.bf16.msra.mxu0 %v1465
        %1987 = vmatpush.bf16.msra.mxu0 %v1463
        %1988 = vmatpush.bf16.msra.mxu0 %v1461
        %1989 = vmatpush.bf16.msra.mxu0 %v1459
        %1990 = vmatpush.bf16.msra.mxu0 %v1457
        %1991 = vmatpush.bf16.msra.mxu0 %v1455
        %1992 = vmatpush.bf16.msra.mxu0 %v1453
        %1993 = vmatpush.bf16.msra.mxu0 %v1451
        %1994 = vmatmul.bf16.gmra.mxu0 %v730
        %v1995 = vpop.f32.mrf.mxu0
        %v1996 = vadd.f32 %v1982, %v1995
        %v1997 = vpop.f32.mrf.mxu0
        %v1998 = vadd.f32 %v1984, %v1997
        %1999 = vdwg.mxu0
        %2000 = vmatpush.bf16.msra.mxu0 %v1481
        %2001 = vmatpush.bf16.msra.mxu0 %v1479
        %2002 = vmatpush.bf16.msra.mxu0 %v1477
        %2003 = vmatpush.bf16.msra.mxu0 %v1475
        %2004 = vmatpush.bf16.msra.mxu0 %v1473
        %2005 = vmatpush.bf16.msra.mxu0 %v1471
        %2006 = vmatpush.bf16.msra.mxu0 %v1469
        %2007 = vmatpush.bf16.msra.mxu0 %v1467
        %2008 = vmatmul.bf16.gmra.mxu0 %v731
        %v2009 = vpop.f32.mrf.mxu0
        %v2010 = vadd.f32 %v1996, %v2009
        %v2011 = vpop.f32.mrf.mxu0
        %v2012 = vadd.f32 %v1998, %v2011
        %2013 = vdwg.mxu0
        %2014 = vmatpush.bf16.msra.mxu0 %v1497
        %2015 = vmatpush.bf16.msra.mxu0 %v1495
        %2016 = vmatpush.bf16.msra.mxu0 %v1493
        %2017 = vmatpush.bf16.msra.mxu0 %v1491
        %2018 = vmatpush.bf16.msra.mxu0 %v1489
        %2019 = vmatpush.bf16.msra.mxu0 %v1487
        %2020 = vmatpush.bf16.msra.mxu0 %v1485
        %2021 = vmatpush.bf16.msra.mxu0 %v1483
        %2022 = vmatmul.bf16.gmra.mxu0 %v732
        %v2023 = vpop.f32.mrf.mxu0
        %v2024 = vadd.f32 %v2010, %v2023
        %v2025 = vpop.f32.mrf.mxu0
        %v2026 = vadd.f32 %v2012, %v2025
        %2027 = vdwg.mxu0
        %2028 = vmatpush.bf16.msra.mxu0 %v1513
        %2029 = vmatpush.bf16.msra.mxu0 %v1511
        %2030 = vmatpush.bf16.msra.mxu0 %v1509
        %2031 = vmatpush.bf16.msra.mxu0 %v1507
        %2032 = vmatpush.bf16.msra.mxu0 %v1505
        %2033 = vmatpush.bf16.msra.mxu0 %v1503
        %2034 = vmatpush.bf16.msra.mxu0 %v1501
        %2035 = vmatpush.bf16.msra.mxu0 %v1499
        %2036 = vmatmul.bf16.gmra.mxu0 %v733
        %v2037 = vpop.f32.mrf.mxu0
        %v2038 = vadd.f32 %v2024, %v2037
        %v2039 = vpop.f32.mrf.mxu0
        %v2040 = vadd.f32 %v2026, %v2039
        %2041 = vdwg.mxu0
        %v2042 = vld [vmem:[%s4] sm:$0x3]
        %v2044 = vperm.slane %v2042, 0
        %v2045 = vperm.slane %v2042, 1
        %v2048 = vadd.f32 %v1870, %v2044
        %v2049 = vadd.f32 %v2038, %v2045
        %v2050 = vadd.f32 %v1872, %v2044
        %v2051 = vadd.f32 %v2040, %v2045
        %v2052 = vmax.f32 %v2048, 0.0
        %v2053 = vmax.f32 %v2049, 0.0
        %v2054 = vmax.f32 %v2050, 0.0
        %v2055 = vmax.f32 %v2051, 0.0
        %v2056 = vpack.c.bf16 %v2054, %v2052
        %v2057 = vpack.c.bf16 %v2055, %v2053
        %v2058 = vld [vmem:[%s5] sm:$0xf]
        %v2059 = vld [vmem:[%s5 + $0x4] sm:$0xf]
        %v2060 = vld [vmem:[%s5 + $0x8] sm:$0xf]
        %v2061 = vld [vmem:[%s5 + $0xc] sm:$0xf]
        %v2062 = vld [vmem:[%s5 + $0x10] sm:$0xf]
        %v2063 = vld [vmem:[%s5 + $0x14] sm:$0xf]
        %v2064 = vld [vmem:[%s5 + $0x18] sm:$0xf]
        %v2065 = vld [vmem:[%s5 + $0x1c] sm:$0xf]
        %v2066 = vld [vmem:[%s5 + $0x20] sm:$0xf]
        %v2067 = vld [vmem:[%s5 + $0x24] sm:$0xf]
        %v2068 = vld [vmem:[%s5 + $0x28] sm:$0xf]
        %v2069 = vld [vmem:[%s5 + $0x2c] sm:$0xf]
        %v2070 = vld [vmem:[%s5 + $0x30] sm:$0xf]
        %v2071 = vld [vmem:[%s5 + $0x34] sm:$0xf]
        %v2072 = vld [vmem:[%s5 + $0x38] sm:$0xf]
        %v2073 = vld [vmem:[%s5 + $0x3c] sm:$0xf]
        %v2074 = vld [vmem:[%s5 + $0x40] sm:$0xf]
        %v2075 = vld [vmem:[%s5 + $0x44] sm:$0xf]
        %v2076 = vld [vmem:[%s5 + $0x48] sm:$0xf]
        %v2077 = vld [vmem:[%s5 + $0x4c] sm:$0xf]
        %v2078 = vld [vmem:[%s5 + $0x50] sm:$0xf]
        %v2079 = vld [vmem:[%s5 + $0x54] sm:$0xf]
        %v2080 = vld [vmem:[%s5 + $0x58] sm:$0xf]
        %v2081 = vld [vmem:[%s5 + $0x5c] sm:$0xf]
        %v2082 = vld [vmem:[%s5 + $0x60] sm:$0xf]
        %v2083 = vld [vmem:[%s5 + $0x64] sm:$0xf]
        %v2084 = vld [vmem:[%s5 + $0x68] sm:$0xf]
        %v2085 = vld [vmem:[%s5 + $0x6c] sm:$0xf]
        %v2086 = vld [vmem:[%s5 + $0x70] sm:$0xf]
        %v2087 = vld [vmem:[%s5 + $0x74] sm:$0xf]
        %v2088 = vld [vmem:[%s5 + $0x78] sm:$0xf]
        %v2089 = vld [vmem:[%s5 + $0x7c] sm:$0xf]
        %v2090 = vld [vmem:[%s6] sm:$0x3]
        %v2092 = vsel %vm653, %v2090, 0
        %2094 = vmatpush.bf16.msra.mxu0 0
        %2095 = vmatpush.bf16.msra.mxu0 0
        %2096 = vmatpush.bf16.msra.mxu0 0
        %2097 = vmatpush.bf16.msra.mxu0 0
        %2098 = vmatpush.bf16.msra.mxu0 0
        %2099 = vmatpush.bf16.msra.mxu0 0
        %2100 = vmatpush.bf16.msra.mxu0 0
        %2101 = vmatpush.bf16.msra.mxu0 %v2092
        %2102 = vmatmul.bf16.gmra.mxu0 %v651
        %v2103 = vpop.f32.mrf.mxu0
        %v2104 = vadd.f32 0.0, %v2103
        %v2105 = vpop.f32.mrf.mxu0
        %v2106 = vadd.f32 0.0, %v2105
        %2107 = vdwg.mxu0
        %v2140 = vunpack.c.l.b16 %v2058
        %v2141 = vunpack.c.l.b16 %v2059
        %v2142 = vunpack.c.l.b16 %v2060
        %v2143 = vunpack.c.l.b16 %v2061
        %v2144 = vunpack.c.l.b16 %v2062
        %v2145 = vunpack.c.l.b16 %v2063
        %v2146 = vunpack.c.l.b16 %v2064
        %v2147 = vunpack.c.l.b16 %v2065
        %v2148 = vunpack.c.l.b16 %v2066
        %v2149 = vunpack.c.l.b16 %v2067
        %v2150 = vunpack.c.l.b16 %v2068
        %v2151 = vunpack.c.l.b16 %v2069
        %v2152 = vunpack.c.l.b16 %v2070
        %v2153 = vunpack.c.l.b16 %v2071
        %v2154 = vunpack.c.l.b16 %v2072
        %v2155 = vunpack.c.l.b16 %v2073
        %v2156 = vunpack.c.l.b16 %v2074
        %v2157 = vunpack.c.l.b16 %v2075
        %v2158 = vunpack.c.l.b16 %v2076
        %v2159 = vunpack.c.l.b16 %v2077
        %v2160 = vunpack.c.l.b16 %v2078
        %v2161 = vunpack.c.l.b16 %v2079
        %v2162 = vunpack.c.l.b16 %v2080
        %v2163 = vunpack.c.l.b16 %v2081
        %v2164 = vunpack.c.l.b16 %v2082
        %v2165 = vunpack.c.l.b16 %v2083
        %v2166 = vunpack.c.l.b16 %v2084
        %v2167 = vunpack.c.l.b16 %v2085
        %v2168 = vunpack.c.l.b16 %v2086
        %v2169 = vunpack.c.l.b16 %v2087
        %v2170 = vunpack.c.l.b16 %v2088
        %v2171 = vunpack.c.l.b16 %v2089
        %v2172 = vpack.c.b16 %v2141, %v2140
        %v2173 = vpack.c.b16 %v2143, %v2142
        %v2174 = vpack.c.b16 %v2145, %v2144
        %v2175 = vpack.c.b16 %v2147, %v2146
        %v2176 = vpack.c.b16 %v2149, %v2148
        %v2177 = vpack.c.b16 %v2151, %v2150
        %v2178 = vpack.c.b16 %v2153, %v2152
        %v2179 = vpack.c.b16 %v2155, %v2154
        %v2180 = vpack.c.b16 %v2157, %v2156
        %v2181 = vpack.c.b16 %v2159, %v2158
        %v2182 = vpack.c.b16 %v2161, %v2160
        %v2183 = vpack.c.b16 %v2163, %v2162
        %v2184 = vpack.c.b16 %v2165, %v2164
        %v2185 = vpack.c.b16 %v2167, %v2166
        %v2186 = vpack.c.b16 %v2169, %v2168
        %v2187 = vpack.c.b16 %v2171, %v2170
        %2204 = vmatpush.bf16.msra.mxu0 %v2179
        %2205 = vmatpush.bf16.msra.mxu0 %v2178
        %2206 = vmatpush.bf16.msra.mxu0 %v2177
        %2207 = vmatpush.bf16.msra.mxu0 %v2176
        %2208 = vmatpush.bf16.msra.mxu0 %v2175
        %2209 = vmatpush.bf16.msra.mxu0 %v2174
        %2210 = vmatpush.bf16.msra.mxu0 %v2173
        %2211 = vmatpush.bf16.msra.mxu0 %v2172
        %2212 = vmatmul.bf16.gmra.mxu0 %v2056
        %v2213 = vpop.f32.mrf.mxu0
        %v2214 = vadd.f32 %v2104, %v2213
        %v2215 = vpop.f32.mrf.mxu0
        %v2216 = vadd.f32 %v2106, %v2215
        %2217 = vdwg.mxu0
        %2218 = vmatpush.bf16.msra.mxu0 %v2187
        %2219 = vmatpush.bf16.msra.mxu0 %v2186
        %2220 = vmatpush.bf16.msra.mxu0 %v2185
        %2221 = vmatpush.bf16.msra.mxu0 %v2184
        %2222 = vmatpush.bf16.msra.mxu0 %v2183
        %2223 = vmatpush.bf16.msra.mxu0 %v2182
        %2224 = vmatpush.bf16.msra.mxu0 %v2181
        %2225 = vmatpush.bf16.msra.mxu0 %v2180
        %2226 = vmatmul.bf16.gmra.mxu0 %v2057
        %v2227 = vpop.f32.mrf.mxu0
        %v2228 = vadd.f32 %v2214, %v2227
        %v2229 = vpop.f32.mrf.mxu0
        %v2230 = vadd.f32 %v2216, %v2229
        %2231 = vdwg.mxu0
        %v2232 = vld [vmem:[%s7] sm:$0x1]
        %v2234 = vperm.slane %v2232, 0
        %v2236 = vadd.f32 %v2228, %v2234
        %v2237 = vadd.f32 %v2230, %v2234
        %v2238 = vmax.f32 %v2236, 0.0
        %v2239 = vmax.f32 %v2237, 0.0
        %v2240 = vpack.c.bf16 %v2239, %v2238
        %v2241 = vld [vmem:[%s8] sm:$0xf]
        %v2242 = vld [vmem:[%s8 + $0x4] sm:$0xf]
        %v2243 = vld [vmem:[%s8 + $0x8] sm:$0xf]
        %v2244 = vld [vmem:[%s8 + $0xc] sm:$0xf]
        %v2245 = vld [vmem:[%s8 + $0x10] sm:$0xf]
        %v2246 = vld [vmem:[%s8 + $0x14] sm:$0xf]
        %v2247 = vld [vmem:[%s8 + $0x18] sm:$0xf]
        %v2248 = vld [vmem:[%s8 + $0x1c] sm:$0xf]
        %v2249 = vld [vmem:[%s9] sm:$0x3]
        %v2251 = vsel %vm653, %v2249, 0
        %2253 = vmatpush.bf16.msra.mxu0 0
        %2254 = vmatpush.bf16.msra.mxu0 0
        %2255 = vmatpush.bf16.msra.mxu0 0
        %2256 = vmatpush.bf16.msra.mxu0 0
        %2257 = vmatpush.bf16.msra.mxu0 0
        %2258 = vmatpush.bf16.msra.mxu0 0
        %2259 = vmatpush.bf16.msra.mxu0 0
        %2260 = vmatpush.bf16.msra.mxu0 %v2251
        %2261 = vmatmul.bf16.gmra.mxu0 %v651
        %v2262 = vpop.f32.mrf.mxu0
        %v2263 = vadd.f32 0.0, %v2262
        %v2264 = vpop.f32.mrf.mxu0
        %v2265 = vadd.f32 0.0, %v2264
        %2266 = vdwg.mxu0
        %v2275 = vunpack.c.l.b16 %v2241
        %v2276 = vunpack.c.l.b16 %v2242
        %v2277 = vunpack.c.l.b16 %v2243
        %v2278 = vunpack.c.l.b16 %v2244
        %v2279 = vunpack.c.l.b16 %v2245
        %v2280 = vunpack.c.l.b16 %v2246
        %v2281 = vunpack.c.l.b16 %v2247
        %v2282 = vunpack.c.l.b16 %v2248
        %v2283 = vpack.c.b16 %v2276, %v2275
        %v2284 = vpack.c.b16 %v2278, %v2277
        %v2285 = vpack.c.b16 %v2280, %v2279
        %v2286 = vpack.c.b16 %v2282, %v2281
        %vm2291 = vcmask 523264
        %v2293 = vsel %vm2291, %v2240, 0
        %2295 = vmatpush.bf16.msra.mxu0 0
        %2296 = vmatpush.bf16.msra.mxu0 0
        %2297 = vmatpush.bf16.msra.mxu0 0
        %2298 = vmatpush.bf16.msra.mxu0 0
        %2299 = vmatpush.bf16.msra.mxu0 %v2286
        %2300 = vmatpush.bf16.msra.mxu0 %v2285
        %2301 = vmatpush.bf16.msra.mxu0 %v2284
        %2302 = vmatpush.bf16.msra.mxu0 %v2283
        %2303 = vmatmul.bf16.gmra.mxu0 %v2293
        %v2304 = vpop.f32.mrf.mxu0
        %v2305 = vadd.f32 %v2263, %v2304
        %v2306 = vpop.f32.mrf.mxu0
        %v2307 = vadd.f32 %v2265, %v2306
        %2308 = vdwg.mxu0
        %v2309 = vld [vmem:[%s10] sm:$0x1]
        %v2311 = vperm.slane %v2309, 0
        %v2313 = vadd.f32 %v2305, %v2311
        %v2314 = vadd.f32 %v2307, %v2311
        %v2315 = vmax.f32 %v2313, 0.0
        %v2316 = vmax.f32 %v2314, 0.0
        %vm2317 = vcmask 64512
        %2318 = vst.msk [vmem:[%s430] sm:$0xff] %vm2317, %v2315
        %2319 = vst.msk [vmem:[%s430 + $0x8] sm:$0xff] %vm2317, %v2316
        %s2320 = smul.u32 2, %s23
        %p2321 = scmp.lt.s32.totalorder %s2320, 3
        %s2322 = scalar_select %p2321, %s2320, 3
        %s2323 = smul.addr %s2322, 8
        %s2324 = scalar_lea.vmem %s11, %s2323
        // Predicated region
        $region69: #{_lambda_.1} parent=63 // pred_check
          %p2325 = pneg %p282
        $region70: #{_lambda_.1} parent=63 // pred_check_branch
          %2327 = sbr.rel (%p2325) target = $region72
        $region71: #{_lambda_.1} parent=63 // pred_region
          %s2328 = smul.u32 2, %s23
        $region72: #{_lambda_.1} parent=63 // pred_fallthru
          _
      $region64: #{_lambda_.1} parent=5 // pred_fallthru
        _
      %p2329 = scmp.le.s32.totalorder 2, %s18
      // Predicated region
      $region73: #{_lambda_.1} parent=5 // pred_check
        %p2330 = pneg %p2329
      $region74: #{_lambda_.1} parent=5 // pred_check_branch
        %2332 = sbr.rel (%p2330) target = $region76
      $region75: #{_lambda_.1} parent=5 // pred_region
        %s2333 = ssub.s32 %s18, 2
        // Predicated region
        $region77: #{_lambda_.1} parent=75 // pred_check
          %p2334 = pneg %p288
        $region78: #{_lambda_.1} parent=75 // pred_check_branch
          %2336 = sbr.rel (%p2334) target = $region80
        $region79: #{_lambda_.1} parent=75 // pred_region
          %s2337 = smul.u32 2, %s24
          %p2338 = scmp.lt.s32.totalorder %s2337, 3
          %s2339 = scalar_select %p2338, %s2337, 3
          %s2340 = smul.addr %s2339, 8
          %s2341 = scalar_lea.vmem %s11, %s2340
        $region80: #{_lambda_.1} parent=75 // pred_fallthru
          _
      $region76: #{_lambda_.1} parent=5 // pred_fallthru
        _
    $region6: #{_lambda_.1} parent=1 // loop_footer
      %s22 = sadd.s32 1, %s18
    $region7: #{_lambda_.1} parent=1 // loop_footer_branch
      %17 = sbr.rel target = $region3
    $region8: #{_lambda_.1} parent=1 // loop_exit
      _
    %2342 = vsyncpa [#allocation3], 1
    %s2343 = scalar_lea.sflag [#allocation3], 1
    %2344 = vsyncpa %s2343, 1

</llo_original>
